<compile_context>
chip_gen: v6e
topology: v6e:2x2x1
jax: 0.10.0
libtpu: 0.0.40
codegen_flags: <defaults>
</compile_context>

<pallas_src>
import functools

import jax
import jax.numpy as jnp
from jax.experimental import pallas as pl
from jax.experimental.pallas import tpu as pltpu


def discriminator_kernel(x_ref, lbl_ref, w1_ref, w23_ref, w4_ref, out_ref,
                         *, batch_total, tile_b):
    """One batch tile: 4-layer MLP + masked cross-entropy partial sum."""

    def linear(h, w_aug):
        # w_aug: (fan_in + 1, fan_out) bf16; last row is the bias.
        return (jnp.dot(h, w_aug[:-1, :], preferred_element_type=jnp.float32)
                + w_aug[-1:, :].astype(jnp.float32))

    x = x_ref[...]                                   # (TB, S)   bf16
    w23 = w23_ref[...]                               # (2, H+1, H) bf16

    h = jnp.maximum(linear(x, w1_ref[...]), 0.0).astype(jnp.bfloat16)
    h = jnp.maximum(linear(h, w23[0]), 0.0).astype(jnp.bfloat16)
    h = jnp.maximum(linear(h, w23[1]), 0.0).astype(jnp.bfloat16)
    logits = linear(h, w4_ref[...])                  # (TB, N)   f32

    tb, n = logits.shape

    # Stable cross-entropy: CE_i = logsumexp(logits_i) - logits_i[label_i]
    m = jnp.max(logits, axis=1, keepdims=True)                            # (TB,1)
    lse = m + jnp.log(jnp.sum(jnp.exp(logits - m), axis=1, keepdims=True))

    cls_ids = jax.lax.broadcasted_iota(jnp.int32, (tb, n), dimension=1)
    onehot = (cls_ids == lbl_ref[...]).astype(jnp.float32)                # lbl (TB,1)
    picked = jnp.sum(onehot * logits, axis=1, keepdims=True)              # (TB,1)
    ce = lse - picked                                                     # (TB,1)

    # Mask out padded rows (global row index >= real batch size).
    row = (jax.lax.broadcasted_iota(jnp.int32, (tb, 1), dimension=0)
           + pl.program_id(0) * tile_b)
    valid = (row < batch_total).astype(jnp.float32)

    part = jnp.sum(ce * valid, axis=0, keepdims=True)                     # (1,1)
    out_ref[...] = part[None]                                             # (1,1,1)


def discriminator_forward(x, labels, params, *, tile_b=128):
    """x: (B, state_size) f32/bf16, labels: (B,) int, params from init_params."""
    B, S = x.shape
    H = params["w1"].shape[1]
    N = params["w4"].shape[1]

    num_tiles = pl.cdiv(B, tile_b)
    B_pad = num_tiles * tile_b
    if B_pad != B:
        x = jnp.pad(x, ((0, B_pad - B), (0, 0)))
        labels = jnp.pad(labels, (0, B_pad - B))

    x_bf = x.astype(jnp.bfloat16)
    labels2d = labels.reshape(B_pad, 1).astype(jnp.int32)

    kernel = functools.partial(discriminator_kernel,
                               batch_total=B, tile_b=tile_b)

    partials = pl.pallas_call(
        kernel,
        out_shape=jax.ShapeDtypeStruct((num_tiles, 1, 1), jnp.float32),
        grid_spec=pltpu.PrefetchScalarGridSpec(
            num_scalar_prefetch=0,
            grid=(num_tiles,),
            in_specs=[
                pl.BlockSpec((tile_b, S), lambda i: (i, 0)),        # x tile
                pl.BlockSpec((tile_b, 1), lambda i: (i, 0)),        # labels tile
                pl.BlockSpec((S + 1, H), lambda i: (0, 0)),         # w1 (resident)
                pl.BlockSpec((2, H + 1, H), lambda i: (0, 0, 0)),   # w2, w3 (resident)
                pl.BlockSpec((H + 1, N), lambda i: (0, 0)),         # w4 (resident)
            ],
            out_specs=pl.BlockSpec((1, 1, 1), lambda i: (i, 0, 0)),
        ),
        compiler_params=pltpu.CompilerParams(
            dimension_semantics=("parallel",)),
    )(x_bf, labels2d, params["w1"], params["w23"], params["w4"])

    # Normalize by the GLOBAL batch size (padded rows were masked to 0).
    return jnp.sum(partials) / B


def init_params(key, state_size, hidden_size, n):
    """PyTorch-Linear-style init; bias folded in as the last row, stored bf16."""
    def linear_aug(k, fan_in, fan_out):
        kw, kb = jax.random.split(k)
        bound = 1.0 / (fan_in ** 0.5)
        w = jax.random.uniform(kw, (fan_in, fan_out), jnp.float32, -bound, bound)
        b = jax.random.uniform(kb, (1, fan_out), jnp.float32, -bound, bound)
        return jnp.concatenate([w, b], axis=0).astype(jnp.bfloat16)

    k1, k2, k3, k4 = jax.random.split(key, 4)
    w1 = linear_aug(k1, state_size, hidden_size)
    w2 = linear_aug(k2, hidden_size, hidden_size)
    w3 = linear_aug(k3, hidden_size, hidden_size)
    w4 = linear_aug(k4, hidden_size, n)
    return dict(w1=w1, w23=jnp.stack([w2, w3]), w4=w4)


def reference_forward(x, labels, p):
    """Pure-JAX reference using the same bf16 parameters / activation casts."""
    def lin(h, wa):
        w = wa.astype(jnp.float32)
        return h @ w[:-1] + w[-1:]

    def relu_bf16(z):
        return jnp.maximum(z, 0.0).astype(jnp.bfloat16).astype(jnp.float32)

    xf = x.astype(jnp.bfloat16).astype(jnp.float32)
    h = relu_bf16(lin(xf, p["w1"]))
    h = relu_bf16(lin(h, p["w23"][0]))
    h = relu_bf16(lin(h, p["w23"][1]))
    logits = lin(h, p["w4"])
    logp = jax.nn.log_softmax(logits, axis=1)
    ce = -jnp.take_along_axis(logp, labels[:, None], axis=1)[:, 0]
    return ce.mean()


if __name__ == "__main__":
    B, STATE, HIDDEN, N = 200, 32, 128, 8   # B not a tile multiple -> exercises masking
    TB = 128

    key = jax.random.PRNGKey(0)
    k_params, k_x, k_lbl = jax.random.split(key, 3)

    params = init_params(k_params, STATE, HIDDEN, N)
    x = jax.random.normal(k_x, (B, STATE), jnp.float32)
    skill = jax.random.randint(k_lbl, (B,), 0, N, jnp.int32)

    loss = discriminator_forward(x, skill, params, tile_b=TB)
    jax.block_until_ready(loss)

    ref = reference_forward(x, skill, params)
    assert jnp.allclose(loss, ref, atol=1e-3, rtol=1e-3), (loss, ref)

    print("KERNEL_OK")
</pallas_src>

<mosaic_0001>
module attributes {stable_mosaic.version = 11 : i64} {
  func.func @discriminator_kernel(%arg0: i32, %arg1: memref<128x32xbf16, #tpu.memory_space<vmem>>, %arg2: memref<128x1xi32, #tpu.memory_space<vmem>>, %arg3: memref<33x128xbf16, #tpu.memory_space<vmem>>, %arg4: memref<2x129x128xbf16, #tpu.memory_space<vmem>>, %arg5: memref<129x8xbf16, #tpu.memory_space<vmem>>, %arg6: memref<1x1x1xf32, #tpu.memory_space<vmem>>) attributes {dimension_semantics = [#tpu.dimension_semantics<parallel>], iteration_bounds = array<i64: 2>, scalar_prefetch = 0 : i64, scratch_operands = 0 : i64, tpu.core_type = #tpu.core_type<tc>, window_params = [{transform_indices = @transform_0, window_bounds = array<i64: 128, 32>}, {transform_indices = @transform_1, window_bounds = array<i64: 128, 1>}, {pipeline_mode = #tpu.pipeline_mode<synchronous>, transform_indices = @transform_2, window_bounds = array<i64: 33, 128>}, {pipeline_mode = #tpu.pipeline_mode<synchronous>, transform_indices = @transform_3, window_bounds = array<i64: 2, 129, 128>}, {pipeline_mode = #tpu.pipeline_mode<synchronous>, transform_indices = @transform_4, window_bounds = array<i64: 129, 8>}, {transform_indices = @transform_5, window_bounds = array<i64: 1, 1, 1>}]} {
    %c0 = arith.constant 0 : index
    %c0_0 = arith.constant 0 : index
    %0 = vector.load %arg1[%c0, %c0_0] : memref<128x32xbf16, #tpu.memory_space<vmem>>, vector<128x32xbf16>
    %c0_1 = arith.constant 0 : index
    %c0_2 = arith.constant 0 : index
    %c0_3 = arith.constant 0 : index
    %1 = vector.load %arg4[%c0_1, %c0_2, %c0_3] : memref<2x129x128xbf16, #tpu.memory_space<vmem>>, vector<2x129x128xbf16>
    %c0_4 = arith.constant 0 : index
    %c0_5 = arith.constant 0 : index
    %2 = vector.load %arg3[%c0_4, %c0_5] : memref<33x128xbf16, #tpu.memory_space<vmem>>, vector<33x128xbf16>
    %3 = vector.extract_strided_slice %2 {offsets = [0, 0], sizes = [32, 128], strides = [1, 1]} : vector<33x128xbf16> to vector<32x128xbf16>
    %cst = arith.constant dense<0.000000e+00> : vector<128x128xf32>
    %4 = tpu.matmul %0, %3, %cst {dimension_numbers = #tpu.dot_dimension_numbers<[1], [0], [0], [1], [0, 0, 1, 1], [], []>} : vector<128x32xbf16>, vector<32x128xbf16>, vector<128x128xf32> -> vector<128x128xf32>
    %5 = vector.extract_strided_slice %2 {offsets = [32, 0], sizes = [1, 128], strides = [1, 1]} : vector<33x128xbf16> to vector<1x128xbf16>
    %6 = arith.extf %5 : vector<1x128xbf16> to vector<1x128xf32>
    %7 = vector.broadcast %6 : vector<1x128xf32> to vector<128x128xf32>
    %8 = arith.addf %4, %7 : vector<128x128xf32>
    %cst_6 = arith.constant 0.000000e+00 : f32
    %9 = vector.broadcast %cst_6 : f32 to vector<128x128xf32>
    %10 = arith.maximumf %8, %9 : vector<128x128xf32>
    %11 = arith.truncf %10 : vector<128x128xf32> to vector<128x128xbf16>
    %12 = vector.extract_strided_slice %1 {offsets = [0, 0, 0], sizes = [1, 129, 128], strides = [1, 1, 1]} : vector<2x129x128xbf16> to vector<1x129x128xbf16>
    %13 = vector.shape_cast %12 : vector<1x129x128xbf16> to vector<129x128xbf16>
    %14 = vector.extract_strided_slice %13 {offsets = [0, 0], sizes = [128, 128], strides = [1, 1]} : vector<129x128xbf16> to vector<128x128xbf16>
    %cst_7 = arith.constant dense<0.000000e+00> : vector<128x128xf32>
    %15 = tpu.matmul %11, %14, %cst_7 {dimension_numbers = #tpu.dot_dimension_numbers<[1], [0], [0], [1], [0, 0, 1, 1], [], []>} : vector<128x128xbf16>, vector<128x128xbf16>, vector<128x128xf32> -> vector<128x128xf32>
    %16 = vector.extract_strided_slice %13 {offsets = [128, 0], sizes = [1, 128], strides = [1, 1]} : vector<129x128xbf16> to vector<1x128xbf16>
    %17 = arith.extf %16 : vector<1x128xbf16> to vector<1x128xf32>
    %18 = vector.broadcast %17 : vector<1x128xf32> to vector<128x128xf32>
    %19 = arith.addf %15, %18 : vector<128x128xf32>
    %cst_8 = arith.constant 0.000000e+00 : f32
    %20 = vector.broadcast %cst_8 : f32 to vector<128x128xf32>
    %21 = arith.maximumf %19, %20 : vector<128x128xf32>
    %22 = arith.truncf %21 : vector<128x128xf32> to vector<128x128xbf16>
    %23 = vector.extract_strided_slice %1 {offsets = [1, 0, 0], sizes = [1, 129, 128], strides = [1, 1, 1]} : vector<2x129x128xbf16> to vector<1x129x128xbf16>
    %24 = vector.shape_cast %23 : vector<1x129x128xbf16> to vector<129x128xbf16>
    %25 = vector.extract_strided_slice %24 {offsets = [0, 0], sizes = [128, 128], strides = [1, 1]} : vector<129x128xbf16> to vector<128x128xbf16>
    %cst_9 = arith.constant dense<0.000000e+00> : vector<128x128xf32>
    %26 = tpu.matmul %22, %25, %cst_9 {dimension_numbers = #tpu.dot_dimension_numbers<[1], [0], [0], [1], [0, 0, 1, 1], [], []>} : vector<128x128xbf16>, vector<128x128xbf16>, vector<128x128xf32> -> vector<128x128xf32>
    %27 = vector.extract_strided_slice %24 {offsets = [128, 0], sizes = [1, 128], strides = [1, 1]} : vector<129x128xbf16> to vector<1x128xbf16>
    %28 = arith.extf %27 : vector<1x128xbf16> to vector<1x128xf32>
    %29 = vector.broadcast %28 : vector<1x128xf32> to vector<128x128xf32>
    %30 = arith.addf %26, %29 : vector<128x128xf32>
    %cst_10 = arith.constant 0.000000e+00 : f32
    %31 = vector.broadcast %cst_10 : f32 to vector<128x128xf32>
    %32 = arith.maximumf %30, %31 : vector<128x128xf32>
    %33 = arith.truncf %32 : vector<128x128xf32> to vector<128x128xbf16>
    %c0_11 = arith.constant 0 : index
    %c0_12 = arith.constant 0 : index
    %34 = vector.load %arg5[%c0_11, %c0_12] : memref<129x8xbf16, #tpu.memory_space<vmem>>, vector<129x8xbf16>
    %35 = vector.extract_strided_slice %34 {offsets = [0, 0], sizes = [128, 8], strides = [1, 1]} : vector<129x8xbf16> to vector<128x8xbf16>
    %cst_13 = arith.constant dense<0.000000e+00> : vector<128x8xf32>
    %36 = tpu.matmul %33, %35, %cst_13 {dimension_numbers = #tpu.dot_dimension_numbers<[1], [0], [0], [1], [0, 0, 1, 1], [], []>} : vector<128x128xbf16>, vector<128x8xbf16>, vector<128x8xf32> -> vector<128x8xf32>
    %37 = vector.extract_strided_slice %34 {offsets = [128, 0], sizes = [1, 8], strides = [1, 1]} : vector<129x8xbf16> to vector<1x8xbf16>
    %38 = arith.extf %37 : vector<1x8xbf16> to vector<1x8xf32>
    %39 = vector.broadcast %38 : vector<1x8xf32> to vector<128x8xf32>
    %40 = arith.addf %36, %39 : vector<128x8xf32>
    %cst_14 = arith.constant dense<0xFF800000> : vector<128xf32>
    %41 = vector.multi_reduction <maximumf>, %40, %cst_14 [1] : vector<128x8xf32> to vector<128xf32>
    %42 = vector.shape_cast %41 : vector<128xf32> to vector<128x1xf32>
    %43 = vector.broadcast %42 : vector<128x1xf32> to vector<128x8xf32>
    %44 = arith.subf %40, %43 : vector<128x8xf32>
    %45 = math.exp %44 : vector<128x8xf32>
    %cst_15 = arith.constant dense<0.000000e+00> : vector<128xf32>
    %46 = vector.multi_reduction <add>, %45, %cst_15 [1] : vector<128x8xf32> to vector<128xf32>
    %47 = vector.shape_cast %46 : vector<128xf32> to vector<128x1xf32>
    %48 = math.log %47 : vector<128x1xf32>
    %49 = arith.addf %42, %48 : vector<128x1xf32>
    %50 = tpu.iota {dimensions = array<i32: 1>} : vector<128x8xi32>
    %c0_16 = arith.constant 0 : index
    %c0_17 = arith.constant 0 : index
    %51 = vector.load %arg2[%c0_16, %c0_17] : memref<128x1xi32, #tpu.memory_space<vmem>>, vector<128x1xi32>
    %52 = vector.broadcast %51 : vector<128x1xi32> to vector<128x8xi32>
    %53 = arith.cmpi eq, %50, %52 : vector<128x8xi32>
    %54 = arith.extui %53 : vector<128x8xi1> to vector<128x8xi32>
    %55 = arith.sitofp %54 : vector<128x8xi32> to vector<128x8xf32>
    %56 = arith.mulf %55, %40 : vector<128x8xf32>
    %cst_18 = arith.constant dense<0.000000e+00> : vector<128xf32>
    %57 = vector.multi_reduction <add>, %56, %cst_18 [1] : vector<128x8xf32> to vector<128xf32>
    %58 = vector.shape_cast %57 : vector<128xf32> to vector<128x1xf32>
    %59 = arith.subf %49, %58 : vector<128x1xf32>
    %60 = tpu.iota {dimensions = array<i32: 0>} : vector<128x1xi32>
    %c128_i32 = arith.constant 128 : i32
    %61 = arith.muli %arg0, %c128_i32 : i32
    %62 = vector.broadcast %61 : i32 to vector<128x1xi32>
    %63 = arith.addi %60, %62 : vector<128x1xi32>
    %c200_i32 = arith.constant 200 : i32
    %64 = vector.broadcast %c200_i32 : i32 to vector<128x1xi32>
    %65 = arith.cmpi slt, %63, %64 : vector<128x1xi32>
    %66 = arith.extui %65 : vector<128x1xi1> to vector<128x1xi32>
    %67 = arith.sitofp %66 : vector<128x1xi32> to vector<128x1xf32>
    %68 = arith.mulf %59, %67 : vector<128x1xf32>
    %cst_19 = arith.constant dense<0.000000e+00> : vector<1xf32>
    %69 = vector.multi_reduction <add>, %68, %cst_19 [0] : vector<128x1xf32> to vector<1xf32>
    %70 = vector.shape_cast %69 : vector<1xf32> to vector<1x1xf32>
    %71 = vector.shape_cast %70 : vector<1x1xf32> to vector<1x1x1xf32>
    %c0_20 = arith.constant 0 : index
    %c0_21 = arith.constant 0 : index
    %c0_22 = arith.constant 0 : index
    %72 = vector.load %arg6[%c0_20, %c0_21, %c0_22] : memref<1x1x1xf32, #tpu.memory_space<vmem>>, vector<1x1x1xf32>
    tpu.vector_store %arg6[%c0_20, %c0_21, %c0_22], %71 {strides = array<i32>} : memref<1x1x1xf32, #tpu.memory_space<vmem>>, vector<1x1x1xf32>,
    return
  }
  func.func @transform_0(%arg0: i32) -> (i32, i32) {
    %c0_i32 = arith.constant 0 : i32
    %c0_i32_0 = arith.constant 0 : i32
    return %arg0, %c0_i32 : i32, i32
  }
  func.func @transform_1(%arg0: i32) -> (i32, i32) {
    %c0_i32 = arith.constant 0 : i32
    %c0_i32_0 = arith.constant 0 : i32
    return %arg0, %c0_i32 : i32, i32
  }
  func.func @transform_2(%arg0: i32) -> (i32, i32) {
    %c0_i32 = arith.constant 0 : i32
    %c0_i32_0 = arith.constant 0 : i32
    %c0_i32_1 = arith.constant 0 : i32
    return %c0_i32, %c0_i32_0 : i32, i32
  }
  func.func @transform_3(%arg0: i32) -> (i32, i32, i32) {
    %c0_i32 = arith.constant 0 : i32
    %c0_i32_0 = arith.constant 0 : i32
    %c0_i32_1 = arith.constant 0 : i32
    %c0_i32_2 = arith.constant 0 : i32
    return %c0_i32, %c0_i32_0, %c0_i32_1 : i32, i32, i32
  }
  func.func @transform_4(%arg0: i32) -> (i32, i32) {
    %c0_i32 = arith.constant 0 : i32
    %c0_i32_0 = arith.constant 0 : i32
    %c0_i32_1 = arith.constant 0 : i32
    return %c0_i32, %c0_i32_0 : i32, i32
  }
  func.func @transform_5(%arg0: i32) -> (i32, i32, i32) {
    %c0_i32 = arith.constant 0 : i32
    %c0_i32_0 = arith.constant 0 : i32
    %c0_i32_1 = arith.constant 0 : i32
    return %arg0, %c0_i32, %c0_i32_0 : i32, i32, i32
  }
}

</mosaic_0001>

<llo_original>
// kernel: tpu_custom_call.1
$region0: #{tpu_custom_call.1}
  #allocation0 [shape = 'u32[]', space=smem, size = 0x4, offset = 0x4, fixed_abs, tag = 'smem constant byte address 0x4 - core index']
  #allocation1 [shape = 'u32[144,128]{1,0:T(1,128)}', space=vmem, size = 0x12000, scoped, tag = 'internal scratch']
  %s0 = inlined_call_operand.vmem [shape: bf16[256,32], index: 0, kind: input, shape index: {}]
  %s1 = inlined_call_operand.vmem [shape: s32[256,1], index: 1, kind: input, shape index: {}]
  %s2 = inlined_call_operand.vmem [shape: bf16[33,128], index: 2, kind: input, shape index: {}]
  %s3 = inlined_call_operand.vmem [shape: bf16[2,129,128], index: 3, kind: input, shape index: {}]
  %s4 = inlined_call_operand.vmem [shape: bf16[129,8], index: 4, kind: input, shape index: {}]
  %s5 = inlined_call_operand.vmem [shape: f32[2,1,1], index: 5, kind: output, shape index: {}]
  %s6 = sld [smem:[#allocation0]]
  $region53: #{tpu_custom_call.1} parent=0
    _
  %s8 = ssub.s32 1, %s6
  %s9 = scalar_select 0, %s8, %s6
  loop: start=0, step=1, limit=4
  $region2: #{tpu_custom_call.1} parent=0 // loop_pre_header
    _
  $region3: #{tpu_custom_call.1} parent=0 // loop_header
    %s11 = sphi 0, %s15
    %p12 = scmp.ge.s32.totalorder %s11, 4
    %s21 = sphi 0, %s23
    %s24 = sphi 0, %s21
    %s25 = sphi 0, %s24
    %s41 = sphi 0, %s25
    %s47 = sphi 0, %s49
    %s50 = sphi 0, %s47
    %s51 = sphi 0, %s50
    %s67 = sphi 0, %s51
    %s71 = sphi 0, %s71
    %s73 = sphi 0, %s71
    %s74 = sphi 0, %s73
    %s88 = sphi 0, %s74
    %s92 = sphi 0, %s92
    %s94 = sphi 0, %s92
    %s95 = sphi 0, %s94
    %s109 = sphi 0, %s95
    %s113 = sphi 0, %s113
    %s115 = sphi 0, %s113
    %s116 = sphi 0, %s115
    %s130 = sphi 0, %s116
    %s136 = sphi 0, %s138
    %s139 = sphi 0, %s136
    %s140 = sphi 0, %s139
    %s156 = sphi 0, %s140
  $region4: #{tpu_custom_call.1} parent=0 // loop_header_branch
    %14 = sbr.rel (%p12) target = $region8
  $region5: #{tpu_custom_call.1} parent=0 // loop_body
    %s16 = ssub.s32 %s11, 1
    %s17 = ssub.s32 %s11, 2
    %s18 = sadd.s32 %s11, 1
    %s19 = ssub.s32 %s11, %s18
    %p20 = scmp.eq.s32.totalorder %s19, 0
    %s22 = sadd.s32 %s21, 1
    %s23 = scalar_select %p20, %s21, %s22
    %p26 = pneg %p20
    %p27 = scmp.eq.s32.totalorder %s11, 1
    %p28 = por %p26, %p27
    %p29 = scmp.ne.s32.totalorder %s21, %s24
    %p30 = scmp.eq.s32.totalorder %s11, 0
    %p31 = por %p29, %p30
    %p32 = scmp.ne.s32.totalorder %s21, %s24
    %p33 = scmp.eq.s32.totalorder %s16, 1
    %p34 = por %p32, %p33
    %p35 = scmp.ne.s32.totalorder %s24, %s25
    %p36 = scmp.eq.s32.totalorder %s16, 0
    %p37 = por %p35, %p36
    %p38 = scmp.ne.s32.totalorder %s24, %s25
    %p39 = scmp.eq.s32.totalorder %s17, 1
    %p40 = por %p38, %p39
    %p42 = scmp.ne.s32.totalorder %s25, %s41
    %p43 = scmp.eq.s32.totalorder %s17, 0
    %p44 = por %p42, %p43
    %s45 = ssub.s32 %s11, %s18
    %p46 = scmp.eq.s32.totalorder %s45, 0
    %s48 = sadd.s32 %s47, 1
    %s49 = scalar_select %p46, %s47, %s48
    %p52 = pneg %p46
    %p53 = scmp.eq.s32.totalorder %s11, 1
    %p54 = por %p52, %p53
    %p55 = scmp.ne.s32.totalorder %s47, %s50
    %p56 = scmp.eq.s32.totalorder %s11, 0
    %p57 = por %p55, %p56
    %p58 = scmp.ne.s32.totalorder %s47, %s50
    %p59 = scmp.eq.s32.totalorder %s16, 1
    %p60 = por %p58, %p59
    %p61 = scmp.ne.s32.totalorder %s50, %s51
    %p62 = scmp.eq.s32.totalorder %s16, 0
    %p63 = por %p61, %p62
    %p64 = scmp.ne.s32.totalorder %s50, %s51
    %p65 = scmp.eq.s32.totalorder %s17, 1
    %p66 = por %p64, %p65
    %p68 = scmp.ne.s32.totalorder %s51, %s67
    %p69 = scmp.eq.s32.totalorder %s17, 0
    %p70 = por %p68, %p69
    %s72 = sadd.s32 %s71, 1
    %p75 = scmp.eq.s32.totalorder %s11, 1
    %p76 = scmp.ne.s32.totalorder %s71, %s73
    %p77 = scmp.eq.s32.totalorder %s11, 0
    %p78 = por %p76, %p77
    %p79 = scmp.ne.s32.totalorder %s71, %s73
    %p80 = scmp.eq.s32.totalorder %s16, 1
    %p81 = por %p79, %p80
    %p82 = scmp.ne.s32.totalorder %s73, %s74
    %p83 = scmp.eq.s32.totalorder %s16, 0
    %p84 = por %p82, %p83
    %p85 = scmp.ne.s32.totalorder %s73, %s74
    %p86 = scmp.eq.s32.totalorder %s17, 1
    %p87 = por %p85, %p86
    %p89 = scmp.ne.s32.totalorder %s74, %s88
    %p90 = scmp.eq.s32.totalorder %s17, 0
    %p91 = por %p89, %p90
    %s93 = sadd.s32 %s92, 1
    %p96 = scmp.eq.s32.totalorder %s11, 1
    %p97 = scmp.ne.s32.totalorder %s92, %s94
    %p98 = scmp.eq.s32.totalorder %s11, 0
    %p99 = por %p97, %p98
    %p100 = scmp.ne.s32.totalorder %s92, %s94
    %p101 = scmp.eq.s32.totalorder %s16, 1
    %p102 = por %p100, %p101
    %p103 = scmp.ne.s32.totalorder %s94, %s95
    %p104 = scmp.eq.s32.totalorder %s16, 0
    %p105 = por %p103, %p104
    %p106 = scmp.ne.s32.totalorder %s94, %s95
    %p107 = scmp.eq.s32.totalorder %s17, 1
    %p108 = por %p106, %p107
    %p110 = scmp.ne.s32.totalorder %s95, %s109
    %p111 = scmp.eq.s32.totalorder %s17, 0
    %p112 = por %p110, %p111
    %s114 = sadd.s32 %s113, 1
    %p117 = scmp.eq.s32.totalorder %s11, 1
    %p118 = scmp.ne.s32.totalorder %s113, %s115
    %p119 = scmp.eq.s32.totalorder %s11, 0
    %p120 = por %p118, %p119
    %p121 = scmp.ne.s32.totalorder %s113, %s115
    %p122 = scmp.eq.s32.totalorder %s16, 1
    %p123 = por %p121, %p122
    %p124 = scmp.ne.s32.totalorder %s115, %s116
    %p125 = scmp.eq.s32.totalorder %s16, 0
    %p126 = por %p124, %p125
    %p127 = scmp.ne.s32.totalorder %s115, %s116
    %p128 = scmp.eq.s32.totalorder %s17, 1
    %p129 = por %p127, %p128
    %p131 = scmp.ne.s32.totalorder %s116, %s130
    %p132 = scmp.eq.s32.totalorder %s17, 0
    %p133 = por %p131, %p132
    %s134 = ssub.s32 %s11, %s18
    %p135 = scmp.eq.s32.totalorder %s134, 0
    %s137 = sadd.s32 %s136, 1
    %s138 = scalar_select %p135, %s136, %s137
    %p141 = pneg %p135
    %p142 = scmp.eq.s32.totalorder %s11, 1
    %p143 = por %p141, %p142
    %p144 = scmp.ne.s32.totalorder %s136, %s139
    %p145 = scmp.eq.s32.totalorder %s11, 0
    %p146 = por %p144, %p145
    %p147 = scmp.ne.s32.totalorder %s136, %s139
    %p148 = scmp.eq.s32.totalorder %s16, 1
    %p149 = por %p147, %p148
    %p150 = scmp.ne.s32.totalorder %s139, %s140
    %p151 = scmp.eq.s32.totalorder %s16, 0
    %p152 = por %p150, %p151
    %p153 = scmp.ne.s32.totalorder %s139, %s140
    %p154 = scmp.eq.s32.totalorder %s17, 1
    %p155 = por %p153, %p154
    %p157 = scmp.ne.s32.totalorder %s140, %s156
    %p158 = scmp.eq.s32.totalorder %s17, 0
    %p159 = por %p157, %p158
    %p160 = scmp.le.s32.totalorder 1, %s11
    %p161 = scmp.lt.s32.totalorder %s11, 3
    %p162 = pnand %p160, %p161
    %p163 = pneg %p162
    // Predicated region
    $region9: #{tpu_custom_call.1} parent=5 // pred_check
      _
    $region10: #{tpu_custom_call.1} parent=5 // pred_check_branch
      %165 = sbr.rel (%p162) target = $region12
    $region11: #{tpu_custom_call.1} parent=5 // pred_region
      %s166 = ssub.s32 %s11, 1
      // Predicated region
      $region13: #{tpu_custom_call.1} parent=11 // pred_check
        %p167 = pneg %p84
      $region14: #{tpu_custom_call.1} parent=11 // pred_check_branch
        %169 = sbr.rel (%p167) target = $region16
      $region15: #{tpu_custom_call.1} parent=11 // pred_region
        _
      $region16: #{tpu_custom_call.1} parent=11 // pred_fallthru
        _
      // Predicated region
      $region17: #{tpu_custom_call.1} parent=11 // pred_check
        %p170 = pneg %p105
      $region18: #{tpu_custom_call.1} parent=11 // pred_check_branch
        %172 = sbr.rel (%p170) target = $region20
      $region19: #{tpu_custom_call.1} parent=11 // pred_region
        _
      $region20: #{tpu_custom_call.1} parent=11 // pred_fallthru
        _
      // Predicated region
      $region21: #{tpu_custom_call.1} parent=11 // pred_check
        %p173 = pneg %p126
      $region22: #{tpu_custom_call.1} parent=11 // pred_check_branch
        %175 = sbr.rel (%p173) target = $region24
      $region23: #{tpu_custom_call.1} parent=11 // pred_region
        _
      $region24: #{tpu_custom_call.1} parent=11 // pred_fallthru
        _
    $region12: #{tpu_custom_call.1} parent=5 // pred_fallthru
      _
    %p176 = scmp.lt.s32.totalorder %s11, 2
    // Predicated region
    $region25: #{tpu_custom_call.1} parent=5 // pred_check
      %p177 = pneg %p176
    $region26: #{tpu_custom_call.1} parent=5 // pred_check_branch
      %179 = sbr.rel (%p177) target = $region28
    $region27: #{tpu_custom_call.1} parent=5 // pred_region
      // Predicated region
      $region29: #{tpu_custom_call.1} parent=27 // pred_check
        %p180 = pneg %p31
      $region30: #{tpu_custom_call.1} parent=27 // pred_check_branch
        %182 = sbr.rel (%p180) target = $region32
      $region31: #{tpu_custom_call.1} parent=27 // pred_region
        %s183 = smul.u32 16, %s11
        %p184 = scmp.lt.s32.totalorder %s183, 31
        %s185 = scalar_select %p184, %s183, 31
        %s186 = smul.addr %s185, 4
        %s187 = scalar_lea.vmem %s0, %s186
        %s188 = smul.u32 16, %s11
      $region32: #{tpu_custom_call.1} parent=27 // pred_fallthru
        _
      // Predicated region
      $region33: #{tpu_custom_call.1} parent=27 // pred_check
        %p189 = pneg %p57
      $region34: #{tpu_custom_call.1} parent=27 // pred_check_branch
        %191 = sbr.rel (%p189) target = $region36
      $region35: #{tpu_custom_call.1} parent=27 // pred_region
        %s192 = smul.u32 16, %s11
        %p193 = scmp.lt.s32.totalorder %s192, 31
        %s194 = scalar_select %p193, %s192, 31
        %s195 = smul.addr %s194, 8
        %s196 = scalar_lea.vmem %s1, %s195
        %s197 = smul.u32 16, %s11
      $region36: #{tpu_custom_call.1} parent=27 // pred_fallthru
        _
    $region28: #{tpu_custom_call.1} parent=5 // pred_fallthru
      _
    %p198 = scmp.le.s32.totalorder 1, %s11
    %p199 = scmp.lt.s32.totalorder %s11, 3
    %p200 = pnand %p198, %p199
    %p201 = pneg %p200
    // Predicated region
    $region37: #{tpu_custom_call.1} parent=5 // pred_check
      _
    $region38: #{tpu_custom_call.1} parent=5 // pred_check_branch
      %203 = sbr.rel (%p200) target = $region40
    $region39: #{tpu_custom_call.1} parent=5 // pred_region
      %s204 = ssub.s32 %s11, 1
      %s205 = smul.u32 16, %s16
      %p206 = scmp.lt.s32.totalorder %s205, 31
      %s207 = scalar_select %p206, %s205, 31
      %s208 = smul.addr %s207, 4
      %s209 = scalar_lea.vmem %s0, %s208
      %p210 = pneg %p37
      %p211 = pneg %p34
      %s212 = smul.u32 16, %s16
      %p213 = scmp.lt.s32.totalorder %s212, 31
      %s214 = scalar_select %p213, %s212, 31
      %s215 = smul.addr %s214, 8
      %s216 = scalar_lea.vmem %s1, %s215
      %p217 = pneg %p63
      %p218 = pneg %p60
      %p219 = pneg %p84
      %p220 = pneg %p81
      %p221 = pneg %p105
      %p222 = pneg %p102
      %p223 = pneg %p126
      %p224 = pneg %p123
      %p225 = pneg %p152
      %p226 = pneg %p149
      %p227 = scmp.lt.s32.totalorder %s16, 1
      %s228 = scalar_select %p227, %s16, 1
      %s229 = scalar_lea.vmem %s5, %s228
      %s230 = smul.u32 16, %s16
      %p231 = scmp.lt.s32.totalorder %s230, 31
      %s232 = scalar_select %p231, %s230, 31
      %s233 = smul.addr %s232, 4
      %s234 = scalar_lea.vmem %s0, %s233
      %s235 = smul.u32 16, %s16
      %s236 = smul.u32 16, %s16
      %p237 = scmp.lt.s32.totalorder %s236, 31
      %s238 = scalar_select %p237, %s236, 31
      %s239 = smul.addr %s238, 8
      %s240 = scalar_lea.vmem %s1, %s239
      %s241 = smul.u32 16, %s16
      %p242 = scmp.lt.s32.totalorder %s16, 1
      %s243 = scalar_select %p242, %s16, 1
      %s244 = scalar_lea.vmem %s5, %s243
      %v246 = vld [vmem:[%s234] sm:$0xf]
      %v247 = vld [vmem:[%s234 + $0x4] sm:$0xf]
      %v248 = vld [vmem:[%s234 + $0x8] sm:$0xf]
      %v249 = vld [vmem:[%s234 + $0xc] sm:$0xf]
      %v250 = vld [vmem:[%s234 + $0x10] sm:$0xf]
      %v251 = vld [vmem:[%s234 + $0x14] sm:$0xf]
      %v252 = vld [vmem:[%s234 + $0x18] sm:$0xf]
      %v253 = vld [vmem:[%s234 + $0x1c] sm:$0xf]
      %v254 = vld [vmem:[%s234 + $0x20] sm:$0xf]
      %v255 = vld [vmem:[%s234 + $0x24] sm:$0xf]
      %v256 = vld [vmem:[%s234 + $0x28] sm:$0xf]
      %v257 = vld [vmem:[%s234 + $0x2c] sm:$0xf]
      %v258 = vld [vmem:[%s234 + $0x30] sm:$0xf]
      %v259 = vld [vmem:[%s234 + $0x34] sm:$0xf]
      %v260 = vld [vmem:[%s234 + $0x38] sm:$0xf]
      %v261 = vld [vmem:[%s234 + $0x3c] sm:$0xf]
      %v262 = vld [vmem:[%s3] sm:$0xf]
      %v263 = vld [vmem:[%s3 + $0x4] sm:$0xf]
      %v264 = vld [vmem:[%s3 + $0x8] sm:$0xf]
      %v265 = vld [vmem:[%s3 + $0xc] sm:$0xf]
      %v266 = vld [vmem:[%s3 + $0x10] sm:$0xf]
      %v267 = vld [vmem:[%s3 + $0x14] sm:$0xf]
      %v268 = vld [vmem:[%s3 + $0x18] sm:$0xf]
      %v269 = vld [vmem:[%s3 + $0x1c] sm:$0xf]
      %v270 = vld [vmem:[%s3 + $0x20] sm:$0xf]
      %v271 = vld [vmem:[%s3 + $0x24] sm:$0xf]
      %v272 = vld [vmem:[%s3 + $0x28] sm:$0xf]
      %v273 = vld [vmem:[%s3 + $0x2c] sm:$0xf]
      %v274 = vld [vmem:[%s3 + $0x30] sm:$0xf]
      %v275 = vld [vmem:[%s3 + $0x34] sm:$0xf]
      %v276 = vld [vmem:[%s3 + $0x38] sm:$0xf]
      %v277 = vld [vmem:[%s3 + $0x3c] sm:$0xf]
      %v278 = vld [vmem:[%s3 + $0x40] sm:$0x1]
      %v279 = vld [vmem:[%s3 + $0x44] sm:$0xf]
      %v280 = vld [vmem:[%s3 + $0x48] sm:$0xf]
      %v281 = vld [vmem:[%s3 + $0x4c] sm:$0xf]
      %v282 = vld [vmem:[%s3 + $0x50] sm:$0xf]
      %v283 = vld [vmem:[%s3 + $0x54] sm:$0xf]
      %v284 = vld [vmem:[%s3 + $0x58] sm:$0xf]
      %v285 = vld [vmem:[%s3 + $0x5c] sm:$0xf]
      %v286 = vld [vmem:[%s3 + $0x60] sm:$0xf]
      %v287 = vld [vmem:[%s3 + $0x64] sm:$0xf]
      %v288 = vld [vmem:[%s3 + $0x68] sm:$0xf]
      %v289 = vld [vmem:[%s3 + $0x6c] sm:$0xf]
      %v290 = vld [vmem:[%s3 + $0x70] sm:$0xf]
      %v291 = vld [vmem:[%s3 + $0x74] sm:$0xf]
      %v292 = vld [vmem:[%s3 + $0x78] sm:$0xf]
      %v293 = vld [vmem:[%s3 + $0x7c] sm:$0xf]
      %v294 = vld [vmem:[%s3 + $0x80] sm:$0xf]
      %v295 = vld [vmem:[%s3 + $0x84] sm:$0x1]
      %v296 = vld [vmem:[%s2] sm:$0xf]
      %v297 = vld [vmem:[%s2 + $0x4] sm:$0xf]
      %v298 = vld [vmem:[%s2 + $0x8] sm:$0xf]
      %v299 = vld [vmem:[%s2 + $0xc] sm:$0xf]
      %v300 = vld [vmem:[%s2 + $0x10] sm:$0x1]
      %v301 = vunpack.c.l.bf16 %v300
      %v302 = vlaneseq
      %v303 = vshrl.u32 %v302, 7
      %v304 = vsub.s32 0, %v303
      %v305 = vrot.slane %v301, %v304
      %v322 = vunpack.c.l.b16 %v246
      %v323 = vunpack.c.l.b16 %v247
      %v324 = vunpack.c.l.b16 %v248
      %v325 = vunpack.c.l.b16 %v249
      %v326 = vunpack.c.l.b16 %v250
      %v327 = vunpack.c.l.b16 %v251
      %v328 = vunpack.c.l.b16 %v252
      %v329 = vunpack.c.l.b16 %v253
      %v330 = vunpack.c.l.b16 %v254
      %v331 = vunpack.c.l.b16 %v255
      %v332 = vunpack.c.l.b16 %v256
      %v333 = vunpack.c.l.b16 %v257
      %v334 = vunpack.c.l.b16 %v258
      %v335 = vunpack.c.l.b16 %v259
      %v336 = vunpack.c.l.b16 %v260
      %v337 = vunpack.c.l.b16 %v261
      %v338 = vpack.c.b16 %v323, %v322
      %v339 = vpack.c.b16 %v325, %v324
      %v340 = vpack.c.b16 %v327, %v326
      %v341 = vpack.c.b16 %v329, %v328
      %v342 = vpack.c.b16 %v331, %v330
      %v343 = vpack.c.b16 %v333, %v332
      %v344 = vpack.c.b16 %v335, %v334
      %v345 = vpack.c.b16 %v337, %v336
      %v350 = vunpack.c.l.b16 %v296
      %v351 = vunpack.c.l.b16 %v297
      %v352 = vunpack.c.l.b16 %v298
      %v353 = vunpack.c.l.b16 %v299
      %v354 = vpack.c.b16 %v351, %v350
      %v355 = vpack.c.b16 %v353, %v352
      %vm358 = vcmask 261120
      %v360 = vsel %vm358, %v338, 0
      %v363 = vsel %vm358, %v339, 0
      %v366 = vsel %vm358, %v340, 0
      %v369 = vsel %vm358, %v341, 0
      %v372 = vsel %vm358, %v342, 0
      %v375 = vsel %vm358, %v343, 0
      %v378 = vsel %vm358, %v344, 0
      %v381 = vsel %vm358, %v345, 0
      %383 = vmatprep.subr.bf16.mxu0 0
      %384 = vmatpush1.bf16.msra.mxu0 0
      %385 = vmatprep.subr.bf16.mxu0 0
      %386 = vmatpush1.bf16.msra.mxu0 0
      %387 = vmatprep.subr.bf16.mxu0 0
      %388 = vmatpush1.bf16.msra.mxu0 0
      %389 = vmatprep.subr.bf16.mxu0 0
      %390 = vmatpush1.bf16.msra.mxu0 0
      %391 = vmatprep.subr.bf16.mxu0 0
      %392 = vmatpush1.bf16.msra.mxu0 0
      %393 = vmatprep.subr.bf16.mxu0 0
      %394 = vmatpush1.bf16.msra.mxu0 0
      %395 = vmatprep.subr.bf16.mxu0 0
      %396 = vmatpush1.bf16.msra.mxu0 %v355
      %397 = vmatprep.subr.bf16.mxu0 0
      %398 = vmatpush1.bf16.msra.mxu0 %v354
      %399 = vmatprep.subr.bf16.mxu0 0
      %400 = vmatpush2.bf16.msra.mxu0 0
      %401 = vmatprep.subr.bf16.mxu0 0
      %402 = vmatpush2.bf16.msra.mxu0 0
      %403 = vmatprep.subr.bf16.mxu0 0
      %404 = vmatpush2.bf16.msra.mxu0 0
      %405 = vmatprep.subr.bf16.mxu0 0
      %406 = vmatpush2.bf16.msra.mxu0 0
      %407 = vmatprep.subr.bf16.mxu0 0
      %408 = vmatpush2.bf16.msra.mxu0 0
      %409 = vmatprep.subr.bf16.mxu0 0
      %410 = vmatpush2.bf16.msra.mxu0 0
      %411 = vmatprep.subr.bf16.mxu0 0
      %412 = vmatpush2.bf16.msra.mxu0 0
      %413 = vmatprep.subr.bf16.mxu0 0
      %414 = vmatpush2.bf16.msra.mxu0 0
      %415 = vmatprep.mubr.bf16.mxu0 0
      %416 = vmatmul.mubr.bf16.gmra.mxu0 %v360
      %v417 = vpop.f32.mrf.mxu0
      %v418 = vadd.f32 %v305, %v417
      %v419 = vpop.f32.mrf.mxu0
      %v420 = vpop.f32.mrf.mxu0
      %v421 = vadd.f32 %v305, %v420
      %v422 = vpop.f32.mrf.mxu0
      %423 = vmatprep.mubr.bf16.mxu0 0
      %424 = vmatmul.mubr.bf16.gmra.mxu0 %v363
      %v425 = vpop.f32.mrf.mxu0
      %v426 = vadd.f32 %v305, %v425
      %v427 = vpop.f32.mrf.mxu0
      %v428 = vpop.f32.mrf.mxu0
      %v429 = vadd.f32 %v305, %v428
      %v430 = vpop.f32.mrf.mxu0
      %431 = vmatprep.mubr.bf16.mxu0 0
      %432 = vmatmul.mubr.bf16.gmra.mxu0 %v366
      %v433 = vpop.f32.mrf.mxu0
      %v434 = vadd.f32 %v305, %v433
      %v435 = vpop.f32.mrf.mxu0
      %v436 = vpop.f32.mrf.mxu0
      %v437 = vadd.f32 %v305, %v436
      %v438 = vpop.f32.mrf.mxu0
      %439 = vmatprep.mubr.bf16.mxu0 0
      %440 = vmatmul.mubr.bf16.gmra.mxu0 %v369
      %v441 = vpop.f32.mrf.mxu0
      %v442 = vadd.f32 %v305, %v441
      %v443 = vpop.f32.mrf.mxu0
      %v444 = vpop.f32.mrf.mxu0
      %v445 = vadd.f32 %v305, %v444
      %v446 = vpop.f32.mrf.mxu0
      %447 = vmatprep.mubr.bf16.mxu0 0
      %448 = vmatmul.mubr.bf16.gmra.mxu0 %v372
      %v449 = vpop.f32.mrf.mxu0
      %v450 = vadd.f32 %v305, %v449
      %v451 = vpop.f32.mrf.mxu0
      %v452 = vpop.f32.mrf.mxu0
      %v453 = vadd.f32 %v305, %v452
      %v454 = vpop.f32.mrf.mxu0
      %455 = vmatprep.mubr.bf16.mxu0 0
      %456 = vmatmul.mubr.bf16.gmra.mxu0 %v375
      %v457 = vpop.f32.mrf.mxu0
      %v458 = vadd.f32 %v305, %v457
      %v459 = vpop.f32.mrf.mxu0
      %v460 = vpop.f32.mrf.mxu0
      %v461 = vadd.f32 %v305, %v460
      %v462 = vpop.f32.mrf.mxu0
      %463 = vmatprep.mubr.bf16.mxu0 0
      %464 = vmatmul.mubr.bf16.gmra.mxu0 %v378
      %v465 = vpop.f32.mrf.mxu0
      %v466 = vadd.f32 %v305, %v465
      %v467 = vpop.f32.mrf.mxu0
      %v468 = vpop.f32.mrf.mxu0
      %v469 = vadd.f32 %v305, %v468
      %v470 = vpop.f32.mrf.mxu0
      %471 = vmatprep.mubr.bf16.mxu0 0
      %472 = vmatmul.mubr.bf16.gmra.mxu0 %v381
      %v473 = vpop.f32.mrf.mxu0
      %v474 = vadd.f32 %v305, %v473
      %v475 = vpop.f32.mrf.mxu0
      %v476 = vpop.f32.mrf.mxu0
      %v477 = vadd.f32 %v305, %v476
      %v478 = vpop.f32.mrf.mxu0
      %479 = vdwg.mxu0
      %v480 = vmax.f32 %v418, 0.0
      %v481 = vmax.f32 %v421, 0.0
      %v482 = vmax.f32 %v426, 0.0
      %v483 = vmax.f32 %v429, 0.0
      %v484 = vmax.f32 %v434, 0.0
      %v485 = vmax.f32 %v437, 0.0
      %v486 = vmax.f32 %v442, 0.0
      %v487 = vmax.f32 %v445, 0.0
      %v488 = vmax.f32 %v450, 0.0
      %v489 = vmax.f32 %v453, 0.0
      %v490 = vmax.f32 %v458, 0.0
      %v491 = vmax.f32 %v461, 0.0
      %v492 = vmax.f32 %v466, 0.0
      %v493 = vmax.f32 %v469, 0.0
      %v494 = vmax.f32 %v474, 0.0
      %v495 = vmax.f32 %v477, 0.0
      %v496 = vpack.c.bf16 %v481, %v480
      %v497 = vpack.c.bf16 %v483, %v482
      %v498 = vpack.c.bf16 %v485, %v484
      %v499 = vpack.c.bf16 %v487, %v486
      %v500 = vpack.c.bf16 %v489, %v488
      %v501 = vpack.c.bf16 %v491, %v490
      %v502 = vpack.c.bf16 %v493, %v492
      %v503 = vpack.c.bf16 %v495, %v494
      %v504 = vunpack.c.l.bf16 %v278
      %v505 = vlaneseq
      %v506 = vshrl.u32 %v505, 7
      %v507 = vsub.s32 0, %v506
      %v508 = vrot.slane %v504, %v507
      %v525 = vunpack.c.l.b16 %v262
      %v526 = vunpack.c.l.b16 %v263
      %v527 = vunpack.c.l.b16 %v264
      %v528 = vunpack.c.l.b16 %v265
      %v529 = vunpack.c.l.b16 %v266
      %v530 = vunpack.c.l.b16 %v267
      %v531 = vunpack.c.l.b16 %v268
      %v532 = vunpack.c.l.b16 %v269
      %v533 = vunpack.c.l.b16 %v270
      %v534 = vunpack.c.l.b16 %v271
      %v535 = vunpack.c.l.b16 %v272
      %v536 = vunpack.c.l.b16 %v273
      %v537 = vunpack.c.l.b16 %v274
      %v538 = vunpack.c.l.b16 %v275
      %v539 = vunpack.c.l.b16 %v276
      %v540 = vunpack.c.l.b16 %v277
      %v541 = vpack.c.b16 %v526, %v525
      %v542 = vpack.c.b16 %v528, %v527
      %v543 = vpack.c.b16 %v530, %v529
      %v544 = vpack.c.b16 %v532, %v531
      %v545 = vpack.c.b16 %v534, %v533
      %v546 = vpack.c.b16 %v536, %v535
      %v547 = vpack.c.b16 %v538, %v537
      %v548 = vpack.c.b16 %v540, %v539
      %557 = vmatprep.subr.bf16.mxu0 0
      %558 = vmatpush1.bf16.msra.mxu0 %v548
      %559 = vmatprep.subr.bf16.mxu0 0
      %560 = vmatpush1.bf16.msra.mxu0 %v547
      %561 = vmatprep.subr.bf16.mxu0 0
      %562 = vmatpush1.bf16.msra.mxu0 %v546
      %563 = vmatprep.subr.bf16.mxu0 0
      %564 = vmatpush1.bf16.msra.mxu0 %v545
      %565 = vmatprep.subr.bf16.mxu0 0
      %566 = vmatpush1.bf16.msra.mxu0 %v544
      %567 = vmatprep.subr.bf16.mxu0 0
      %568 = vmatpush1.bf16.msra.mxu0 %v543
      %569 = vmatprep.subr.bf16.mxu0 0
      %570 = vmatpush1.bf16.msra.mxu0 %v542
      %571 = vmatprep.subr.bf16.mxu0 0
      %572 = vmatpush1.bf16.msra.mxu0 %v541
      %573 = vmatprep.subr.bf16.mxu0 0
      %574 = vmatpush2.bf16.msra.mxu0 0
      %575 = vmatprep.subr.bf16.mxu0 0
      %576 = vmatpush2.bf16.msra.mxu0 0
      %577 = vmatprep.subr.bf16.mxu0 0
      %578 = vmatpush2.bf16.msra.mxu0 0
      %579 = vmatprep.subr.bf16.mxu0 0
      %580 = vmatpush2.bf16.msra.mxu0 0
      %581 = vmatprep.subr.bf16.mxu0 0
      %582 = vmatpush2.bf16.msra.mxu0 0
      %583 = vmatprep.subr.bf16.mxu0 0
      %584 = vmatpush2.bf16.msra.mxu0 0
      %585 = vmatprep.subr.bf16.mxu0 0
      %586 = vmatpush2.bf16.msra.mxu0 0
      %587 = vmatprep.subr.bf16.mxu0 0
      %588 = vmatpush2.bf16.msra.mxu0 0
      %589 = vmatprep.mubr.bf16.mxu0 0
      %590 = vmatmul.mubr.bf16.gmra.mxu0 %v496
      %v591 = vpop.f32.mrf.mxu0
      %v592 = vadd.f32 %v508, %v591
      %v593 = vpop.f32.mrf.mxu0
      %v594 = vpop.f32.mrf.mxu0
      %v595 = vadd.f32 %v508, %v594
      %v596 = vpop.f32.mrf.mxu0
      %597 = vmatprep.mubr.bf16.mxu0 0
      %598 = vmatmul.mubr.bf16.gmra.mxu0 %v497
      %v599 = vpop.f32.mrf.mxu0
      %v600 = vadd.f32 %v508, %v599
      %v601 = vpop.f32.mrf.mxu0
      %v602 = vpop.f32.mrf.mxu0
      %v603 = vadd.f32 %v508, %v602
      %v604 = vpop.f32.mrf.mxu0
      %605 = vmatprep.mubr.bf16.mxu0 0
      %606 = vmatmul.mubr.bf16.gmra.mxu0 %v498
      %v607 = vpop.f32.mrf.mxu0
      %v608 = vadd.f32 %v508, %v607
      %v609 = vpop.f32.mrf.mxu0
      %v610 = vpop.f32.mrf.mxu0
      %v611 = vadd.f32 %v508, %v610
      %v612 = vpop.f32.mrf.mxu0
      %613 = vmatprep.mubr.bf16.mxu0 0
      %614 = vmatmul.mubr.bf16.gmra.mxu0 %v499
      %v615 = vpop.f32.mrf.mxu0
      %v616 = vadd.f32 %v508, %v615
      %v617 = vpop.f32.mrf.mxu0
      %v618 = vpop.f32.mrf.mxu0
      %v619 = vadd.f32 %v508, %v618
      %v620 = vpop.f32.mrf.mxu0
      %621 = vmatprep.mubr.bf16.mxu0 0
      %622 = vmatmul.mubr.bf16.gmra.mxu0 %v500
      %v623 = vpop.f32.mrf.mxu0
      %v624 = vadd.f32 %v508, %v623
      %v625 = vpop.f32.mrf.mxu0
      %v626 = vpop.f32.mrf.mxu0
      %v627 = vadd.f32 %v508, %v626
      %v628 = vpop.f32.mrf.mxu0
      %629 = vmatprep.mubr.bf16.mxu0 0
      %630 = vmatmul.mubr.bf16.gmra.mxu0 %v501
      %v631 = vpop.f32.mrf.mxu0
      %v632 = vadd.f32 %v508, %v631
      %v633 = vpop.f32.mrf.mxu0
      %v634 = vpop.f32.mrf.mxu0
      %v635 = vadd.f32 %v508, %v634
      %v636 = vpop.f32.mrf.mxu0
      %637 = vmatprep.mubr.bf16.mxu0 0
      %638 = vmatmul.mubr.bf16.gmra.mxu0 %v502
      %v639 = vpop.f32.mrf.mxu0
      %v640 = vadd.f32 %v508, %v639
      %v641 = vpop.f32.mrf.mxu0
      %v642 = vpop.f32.mrf.mxu0
      %v643 = vadd.f32 %v508, %v642
      %v644 = vpop.f32.mrf.mxu0
      %645 = vmatprep.mubr.bf16.mxu0 0
      %646 = vmatmul.mubr.bf16.gmra.mxu0 %v503
      %v647 = vpop.f32.mrf.mxu0
      %v648 = vadd.f32 %v508, %v647
      %v649 = vpop.f32.mrf.mxu0
      %v650 = vpop.f32.mrf.mxu0
      %v651 = vadd.f32 %v508, %v650
      %v652 = vpop.f32.mrf.mxu0
      %653 = vdwg.mxu0
      %v654 = vmax.f32 %v592, 0.0
      %v655 = vmax.f32 %v595, 0.0
      %v656 = vmax.f32 %v600, 0.0
      %v657 = vmax.f32 %v603, 0.0
      %v658 = vmax.f32 %v608, 0.0
      %v659 = vmax.f32 %v611, 0.0
      %v660 = vmax.f32 %v616, 0.0
      %v661 = vmax.f32 %v619, 0.0
      %v662 = vmax.f32 %v624, 0.0
      %v663 = vmax.f32 %v627, 0.0
      %v664 = vmax.f32 %v632, 0.0
      %v665 = vmax.f32 %v635, 0.0
      %v666 = vmax.f32 %v640, 0.0
      %v667 = vmax.f32 %v643, 0.0
      %v668 = vmax.f32 %v648, 0.0
      %v669 = vmax.f32 %v651, 0.0
      %v670 = vpack.c.bf16 %v655, %v654
      %v671 = vpack.c.bf16 %v657, %v656
      %v672 = vpack.c.bf16 %v659, %v658
      %v673 = vpack.c.bf16 %v661, %v660
      %v674 = vpack.c.bf16 %v663, %v662
      %v675 = vpack.c.bf16 %v665, %v664
      %v676 = vpack.c.bf16 %v667, %v666
      %v677 = vpack.c.bf16 %v669, %v668
      %v678 = vunpack.c.l.bf16 %v295
      %v679 = vlaneseq
      %v680 = vshrl.u32 %v679, 7
      %v681 = vsub.s32 0, %v680
      %v682 = vrot.slane %v678, %v681
      %v699 = vunpack.c.l.b16 %v279
      %v700 = vunpack.c.l.b16 %v280
      %v701 = vunpack.c.l.b16 %v281
      %v702 = vunpack.c.l.b16 %v282
      %v703 = vunpack.c.l.b16 %v283
      %v704 = vunpack.c.l.b16 %v284
      %v705 = vunpack.c.l.b16 %v285
      %v706 = vunpack.c.l.b16 %v286
      %v707 = vunpack.c.l.b16 %v287
      %v708 = vunpack.c.l.b16 %v288
      %v709 = vunpack.c.l.b16 %v289
      %v710 = vunpack.c.l.b16 %v290
      %v711 = vunpack.c.l.b16 %v291
      %v712 = vunpack.c.l.b16 %v292
      %v713 = vunpack.c.l.b16 %v293
      %v714 = vunpack.c.l.b16 %v294
      %v715 = vpack.c.b16 %v700, %v699
      %v716 = vpack.c.b16 %v702, %v701
      %v717 = vpack.c.b16 %v704, %v703
      %v718 = vpack.c.b16 %v706, %v705
      %v719 = vpack.c.b16 %v708, %v707
      %v720 = vpack.c.b16 %v710, %v709
      %v721 = vpack.c.b16 %v712, %v711
      %v722 = vpack.c.b16 %v714, %v713
      %731 = vmatprep.subr.bf16.mxu0 0
      %732 = vmatpush1.bf16.msra.mxu0 %v722
      %733 = vmatprep.subr.bf16.mxu0 0
      %734 = vmatpush1.bf16.msra.mxu0 %v721
      %735 = vmatprep.subr.bf16.mxu0 0
      %736 = vmatpush1.bf16.msra.mxu0 %v720
      %737 = vmatprep.subr.bf16.mxu0 0
      %738 = vmatpush1.bf16.msra.mxu0 %v719
      %739 = vmatprep.subr.bf16.mxu0 0
      %740 = vmatpush1.bf16.msra.mxu0 %v718
      %741 = vmatprep.subr.bf16.mxu0 0
      %742 = vmatpush1.bf16.msra.mxu0 %v717
      %743 = vmatprep.subr.bf16.mxu0 0
      %744 = vmatpush1.bf16.msra.mxu0 %v716
      %745 = vmatprep.subr.bf16.mxu0 0
      %746 = vmatpush1.bf16.msra.mxu0 %v715
      %747 = vmatprep.subr.bf16.mxu0 0
      %748 = vmatpush2.bf16.msra.mxu0 0
      %749 = vmatprep.subr.bf16.mxu0 0
      %750 = vmatpush2.bf16.msra.mxu0 0
      %751 = vmatprep.subr.bf16.mxu0 0
      %752 = vmatpush2.bf16.msra.mxu0 0
      %753 = vmatprep.subr.bf16.mxu0 0
      %754 = vmatpush2.bf16.msra.mxu0 0
      %755 = vmatprep.subr.bf16.mxu0 0
      %756 = vmatpush2.bf16.msra.mxu0 0
      %757 = vmatprep.subr.bf16.mxu0 0
      %758 = vmatpush2.bf16.msra.mxu0 0
      %759 = vmatprep.subr.bf16.mxu0 0
      %760 = vmatpush2.bf16.msra.mxu0 0
      %761 = vmatprep.subr.bf16.mxu0 0
      %762 = vmatpush2.bf16.msra.mxu0 0
      %763 = vmatprep.mubr.bf16.mxu0 0
      %764 = vmatmul.mubr.bf16.gmra.mxu0 %v670
      %v765 = vpop.f32.mrf.mxu0
      %v766 = vadd.f32 %v682, %v765
      %v767 = vpop.f32.mrf.mxu0
      %v768 = vpop.f32.mrf.mxu0
      %v769 = vadd.f32 %v682, %v768
      %v770 = vpop.f32.mrf.mxu0
      %771 = vmatprep.mubr.bf16.mxu0 0
      %772 = vmatmul.mubr.bf16.gmra.mxu0 %v671
      %v773 = vpop.f32.mrf.mxu0
      %v774 = vadd.f32 %v682, %v773
      %v775 = vpop.f32.mrf.mxu0
      %v776 = vpop.f32.mrf.mxu0
      %v777 = vadd.f32 %v682, %v776
      %v778 = vpop.f32.mrf.mxu0
      %779 = vmatprep.mubr.bf16.mxu0 0
      %780 = vmatmul.mubr.bf16.gmra.mxu0 %v672
      %v781 = vpop.f32.mrf.mxu0
      %v782 = vadd.f32 %v682, %v781
      %v783 = vpop.f32.mrf.mxu0
      %v784 = vpop.f32.mrf.mxu0
      %v785 = vadd.f32 %v682, %v784
      %v786 = vpop.f32.mrf.mxu0
      %787 = vmatprep.mubr.bf16.mxu0 0
      %788 = vmatmul.mubr.bf16.gmra.mxu0 %v673
      %v789 = vpop.f32.mrf.mxu0
      %v790 = vadd.f32 %v682, %v789
      %v791 = vpop.f32.mrf.mxu0
      %v792 = vpop.f32.mrf.mxu0
      %v793 = vadd.f32 %v682, %v792
      %v794 = vpop.f32.mrf.mxu0
      %795 = vmatprep.mubr.bf16.mxu0 0
      %796 = vmatmul.mubr.bf16.gmra.mxu0 %v674
      %v797 = vpop.f32.mrf.mxu0
      %v798 = vadd.f32 %v682, %v797
      %v799 = vpop.f32.mrf.mxu0
      %v800 = vpop.f32.mrf.mxu0
      %v801 = vadd.f32 %v682, %v800
      %v802 = vpop.f32.mrf.mxu0
      %803 = vmatprep.mubr.bf16.mxu0 0
      %804 = vmatmul.mubr.bf16.gmra.mxu0 %v675
      %v805 = vpop.f32.mrf.mxu0
      %v806 = vadd.f32 %v682, %v805
      %v807 = vpop.f32.mrf.mxu0
      %v808 = vpop.f32.mrf.mxu0
      %v809 = vadd.f32 %v682, %v808
      %v810 = vpop.f32.mrf.mxu0
      %811 = vmatprep.mubr.bf16.mxu0 0
      %812 = vmatmul.mubr.bf16.gmra.mxu0 %v676
      %v813 = vpop.f32.mrf.mxu0
      %v814 = vadd.f32 %v682, %v813
      %v815 = vpop.f32.mrf.mxu0
      %v816 = vpop.f32.mrf.mxu0
      %v817 = vadd.f32 %v682, %v816
      %v818 = vpop.f32.mrf.mxu0
      %819 = vmatprep.mubr.bf16.mxu0 0
      %820 = vmatmul.mubr.bf16.gmra.mxu0 %v677
      %v821 = vpop.f32.mrf.mxu0
      %v822 = vadd.f32 %v682, %v821
      %v823 = vpop.f32.mrf.mxu0
      %v824 = vpop.f32.mrf.mxu0
      %v825 = vadd.f32 %v682, %v824
      %v826 = vpop.f32.mrf.mxu0
      %827 = vdwg.mxu0
      %v828 = vmax.f32 %v766, 0.0
      %v829 = vmax.f32 %v769, 0.0
      %v830 = vmax.f32 %v774, 0.0
      %v831 = vmax.f32 %v777, 0.0
      %v832 = vmax.f32 %v782, 0.0
      %v833 = vmax.f32 %v785, 0.0
      %v834 = vmax.f32 %v790, 0.0
      %v835 = vmax.f32 %v793, 0.0
      %v836 = vmax.f32 %v798, 0.0
      %v837 = vmax.f32 %v801, 0.0
      %v838 = vmax.f32 %v806, 0.0
      %v839 = vmax.f32 %v809, 0.0
      %v840 = vmax.f32 %v814, 0.0
      %v841 = vmax.f32 %v817, 0.0
      %v842 = vmax.f32 %v822, 0.0
      %v843 = vmax.f32 %v825, 0.0
      %v844 = vpack.c.bf16 %v829, %v828
      %v845 = vpack.c.bf16 %v831, %v830
      %v846 = vpack.c.bf16 %v833, %v832
      %v847 = vpack.c.bf16 %v835, %v834
      %v848 = vpack.c.bf16 %v837, %v836
      %v849 = vpack.c.bf16 %v839, %v838
      %v850 = vpack.c.bf16 %v841, %v840
      %v851 = vpack.c.bf16 %v843, %v842
      %v852 = vld [vmem:[%s4] sm:$0xf]
      %v853 = vld [vmem:[%s4 + $0x4] sm:$0xf]
      %v854 = vld [vmem:[%s4 + $0x8] sm:$0xf]
      %v855 = vld [vmem:[%s4 + $0xc] sm:$0xf]
      %v856 = vld [vmem:[%s4 + $0x10] sm:$0xf]
      %v857 = vld [vmem:[%s4 + $0x14] sm:$0xf]
      %v858 = vld [vmem:[%s4 + $0x18] sm:$0xf]
      %v859 = vld [vmem:[%s4 + $0x1c] sm:$0xf]
      %v860 = vld [vmem:[%s4 + $0x20] sm:$0xf]
      %v861 = vld [vmem:[%s4 + $0x24] sm:$0xf]
      %v862 = vld [vmem:[%s4 + $0x28] sm:$0xf]
      %v863 = vld [vmem:[%s4 + $0x2c] sm:$0xf]
      %v864 = vld [vmem:[%s4 + $0x30] sm:$0xf]
      %v865 = vld [vmem:[%s4 + $0x34] sm:$0xf]
      %v866 = vld [vmem:[%s4 + $0x38] sm:$0xf]
      %v867 = vld [vmem:[%s4 + $0x3c] sm:$0xf]
      %v868 = vld [vmem:[%s4 + $0x40] sm:$0x1]
      %v869 = vunpack.c.l.bf16 %v868
      %v870 = vlaneseq
      %v871 = vshrl.u32 %v870, 7
      %v872 = vsub.s32 0, %v871
      %v873 = vrot.slane %v869, %v872
      %v890 = vunpack.c.l.b16 %v852
      %v891 = vunpack.c.l.b16 %v853
      %v892 = vunpack.c.l.b16 %v854
      %v893 = vunpack.c.l.b16 %v855
      %v894 = vunpack.c.l.b16 %v856
      %v895 = vunpack.c.l.b16 %v857
      %v896 = vunpack.c.l.b16 %v858
      %v897 = vunpack.c.l.b16 %v859
      %v898 = vunpack.c.l.b16 %v860
      %v899 = vunpack.c.l.b16 %v861
      %v900 = vunpack.c.l.b16 %v862
      %v901 = vunpack.c.l.b16 %v863
      %v902 = vunpack.c.l.b16 %v864
      %v903 = vunpack.c.l.b16 %v865
      %v904 = vunpack.c.l.b16 %v866
      %v905 = vunpack.c.l.b16 %v867
      %v906 = vpack.c.b16 %v891, %v890
      %v907 = vpack.c.b16 %v893, %v892
      %v908 = vpack.c.b16 %v895, %v894
      %v909 = vpack.c.b16 %v897, %v896
      %v910 = vpack.c.b16 %v899, %v898
      %v911 = vpack.c.b16 %v901, %v900
      %v912 = vpack.c.b16 %v903, %v902
      %v913 = vpack.c.b16 %v905, %v904
      %922 = vmatprep.subr.bf16.mxu0 0
      %923 = vmatpush1.bf16.msra.mxu0 %v913
      %924 = vmatprep.subr.bf16.mxu0 0
      %925 = vmatpush1.bf16.msra.mxu0 %v912
      %926 = vmatprep.subr.bf16.mxu0 0
      %927 = vmatpush1.bf16.msra.mxu0 %v911
      %928 = vmatprep.subr.bf16.mxu0 0
      %929 = vmatpush1.bf16.msra.mxu0 %v910
      %930 = vmatprep.subr.bf16.mxu0 0
      %931 = vmatpush1.bf16.msra.mxu0 %v909
      %932 = vmatprep.subr.bf16.mxu0 0
      %933 = vmatpush1.bf16.msra.mxu0 %v908
      %934 = vmatprep.subr.bf16.mxu0 0
      %935 = vmatpush1.bf16.msra.mxu0 %v907
      %936 = vmatprep.subr.bf16.mxu0 0
      %937 = vmatpush1.bf16.msra.mxu0 %v906
      %938 = vmatprep.subr.bf16.mxu0 0
      %939 = vmatpush2.bf16.msra.mxu0 0
      %940 = vmatprep.subr.bf16.mxu0 0
      %941 = vmatpush2.bf16.msra.mxu0 0
      %942 = vmatprep.subr.bf16.mxu0 0
      %943 = vmatpush2.bf16.msra.mxu0 0
      %944 = vmatprep.subr.bf16.mxu0 0
      %945 = vmatpush2.bf16.msra.mxu0 0
      %946 = vmatprep.subr.bf16.mxu0 0
      %947 = vmatpush2.bf16.msra.mxu0 0
      %948 = vmatprep.subr.bf16.mxu0 0
      %949 = vmatpush2.bf16.msra.mxu0 0
      %950 = vmatprep.subr.bf16.mxu0 0
      %951 = vmatpush2.bf16.msra.mxu0 0
      %952 = vmatprep.subr.bf16.mxu0 0
      %953 = vmatpush2.bf16.msra.mxu0 0
      %954 = vmatprep.mubr.bf16.mxu0 0
      %955 = vmatmul.mubr.bf16.gmra.mxu0 %v844
      %v956 = vpop.f32.mrf.mxu0
      %v957 = vadd.f32 %v873, %v956
      %v958 = vpop.f32.mrf.mxu0
      %v959 = vpop.f32.mrf.mxu0
      %v960 = vadd.f32 %v873, %v959
      %v961 = vpop.f32.mrf.mxu0
      %962 = vmatprep.mubr.bf16.mxu0 0
      %963 = vmatmul.mubr.bf16.gmra.mxu0 %v845
      %v964 = vpop.f32.mrf.mxu0
      %v965 = vadd.f32 %v873, %v964
      %v966 = vpop.f32.mrf.mxu0
      %v967 = vpop.f32.mrf.mxu0
      %v968 = vadd.f32 %v873, %v967
      %v969 = vpop.f32.mrf.mxu0
      %970 = vmatprep.mubr.bf16.mxu0 0
      %971 = vmatmul.mubr.bf16.gmra.mxu0 %v846
      %v972 = vpop.f32.mrf.mxu0
      %v973 = vadd.f32 %v873, %v972
      %v974 = vpop.f32.mrf.mxu0
      %v975 = vpop.f32.mrf.mxu0
      %v976 = vadd.f32 %v873, %v975
      %v977 = vpop.f32.mrf.mxu0
      %978 = vmatprep.mubr.bf16.mxu0 0
      %979 = vmatmul.mubr.bf16.gmra.mxu0 %v847
      %v980 = vpop.f32.mrf.mxu0
      %v981 = vadd.f32 %v873, %v980
      %v982 = vpop.f32.mrf.mxu0
      %v983 = vpop.f32.mrf.mxu0
      %v984 = vadd.f32 %v873, %v983
      %v985 = vpop.f32.mrf.mxu0
      %986 = vmatprep.mubr.bf16.mxu0 0
      %987 = vmatmul.mubr.bf16.gmra.mxu0 %v848
      %v988 = vpop.f32.mrf.mxu0
      %v989 = vadd.f32 %v873, %v988
      %v990 = vpop.f32.mrf.mxu0
      %v991 = vpop.f32.mrf.mxu0
      %v992 = vadd.f32 %v873, %v991
      %v993 = vpop.f32.mrf.mxu0
      %994 = vmatprep.mubr.bf16.mxu0 0
      %995 = vmatmul.mubr.bf16.gmra.mxu0 %v849
      %v996 = vpop.f32.mrf.mxu0
      %v997 = vadd.f32 %v873, %v996
      %v998 = vpop.f32.mrf.mxu0
      %v999 = vpop.f32.mrf.mxu0
      %v1000 = vadd.f32 %v873, %v999
      %v1001 = vpop.f32.mrf.mxu0
      %1002 = vmatprep.mubr.bf16.mxu0 0
      %1003 = vmatmul.mubr.bf16.gmra.mxu0 %v850
      %v1004 = vpop.f32.mrf.mxu0
      %v1005 = vadd.f32 %v873, %v1004
      %v1006 = vpop.f32.mrf.mxu0
      %v1007 = vpop.f32.mrf.mxu0
      %v1008 = vadd.f32 %v873, %v1007
      %v1009 = vpop.f32.mrf.mxu0
      %1010 = vmatprep.mubr.bf16.mxu0 0
      %1011 = vmatmul.mubr.bf16.gmra.mxu0 %v851
      %v1012 = vpop.f32.mrf.mxu0
      %v1013 = vadd.f32 %v873, %v1012
      %v1014 = vpop.f32.mrf.mxu0
      %v1015 = vpop.f32.mrf.mxu0
      %v1016 = vadd.f32 %v873, %v1015
      %v1017 = vpop.f32.mrf.mxu0
      %1018 = vdwg.mxu0
      %vm1019 = vcmask 64512
      %v1020 = vsel %vm1019, %v957, -inf
      %1021 = vmax.xlane.f32.xlu0 %v1020
      %v1022 = vpop.xlane.xlu0 %1021
      %v1023 = vsel %vm1019, %v960, -inf
      %1024 = vmax.xlane.f32.xlu0 %v1023
      %v1025 = vpop.xlane.xlu0 %1024
      %v1026 = vsel %vm1019, %v965, -inf
      %1027 = vmax.xlane.f32.xlu0 %v1026
      %v1028 = vpop.xlane.xlu0 %1027
      %v1029 = vsel %vm1019, %v968, -inf
      %1030 = vmax.xlane.f32.xlu0 %v1029
      %v1031 = vpop.xlane.xlu0 %1030
      %v1032 = vsel %vm1019, %v973, -inf
      %1033 = vmax.xlane.f32.xlu0 %v1032
      %v1034 = vpop.xlane.xlu0 %1033
      %v1035 = vsel %vm1019, %v976, -inf
      %1036 = vmax.xlane.f32.xlu0 %v1035
      %v1037 = vpop.xlane.xlu0 %1036
      %v1038 = vsel %vm1019, %v981, -inf
      %1039 = vmax.xlane.f32.xlu0 %v1038
      %v1040 = vpop.xlane.xlu0 %1039
      %v1041 = vsel %vm1019, %v984, -inf
      %1042 = vmax.xlane.f32.xlu0 %v1041
      %v1043 = vpop.xlane.xlu0 %1042
      %v1044 = vsel %vm1019, %v989, -inf
      %1045 = vmax.xlane.f32.xlu0 %v1044
      %v1046 = vpop.xlane.xlu0 %1045
      %v1047 = vsel %vm1019, %v992, -inf
      %1048 = vmax.xlane.f32.xlu0 %v1047
      %v1049 = vpop.xlane.xlu0 %1048
      %v1050 = vsel %vm1019, %v997, -inf
      %1051 = vmax.xlane.f32.xlu0 %v1050
      %v1052 = vpop.xlane.xlu0 %1051
      %v1053 = vsel %vm1019, %v1000, -inf
      %1054 = vmax.xlane.f32.xlu0 %v1053
      %v1055 = vpop.xlane.xlu0 %1054
      %v1056 = vsel %vm1019, %v1005, -inf
      %1057 = vmax.xlane.f32.xlu0 %v1056
      %v1058 = vpop.xlane.xlu0 %1057
      %v1059 = vsel %vm1019, %v1008, -inf
      %1060 = vmax.xlane.f32.xlu0 %v1059
      %v1061 = vpop.xlane.xlu0 %1060
      %v1062 = vsel %vm1019, %v1013, -inf
      %1063 = vmax.xlane.f32.xlu0 %v1062
      %v1064 = vpop.xlane.xlu0 %1063
      %v1065 = vsel %vm1019, %v1016, -inf
      %1066 = vmax.xlane.f32.xlu0 %v1065
      %v1067 = vpop.xlane.xlu0 %1066
      %v1068 = vsub.f32 %v957, %v1022
      %v1069 = vsub.f32 %v960, %v1025
      %v1070 = vsub.f32 %v965, %v1028
      %v1071 = vsub.f32 %v968, %v1031
      %v1072 = vsub.f32 %v973, %v1034
      %v1073 = vsub.f32 %v976, %v1037
      %v1074 = vsub.f32 %v981, %v1040
      %v1075 = vsub.f32 %v984, %v1043
      %v1076 = vsub.f32 %v989, %v1046
      %v1077 = vsub.f32 %v992, %v1049
      %v1078 = vsub.f32 %v997, %v1052
      %v1079 = vsub.f32 %v1000, %v1055
      %v1080 = vsub.f32 %v1005, %v1058
      %v1081 = vsub.f32 %v1008, %v1061
      %v1082 = vsub.f32 %v1013, %v1064
      %v1083 = vsub.f32 %v1016, %v1067
      %v1084 = vmul.f32 %v1068, 1.442695
      %v1085 = vpow.pop %v1084
      %v1086 = vmul.f32 %v1069, 1.442695
      %v1087 = vpow.pop %v1086
      %v1088 = vmul.f32 %v1070, 1.442695
      %v1089 = vpow.pop %v1088
      %v1090 = vmul.f32 %v1071, 1.442695
      %v1091 = vpow.pop %v1090
      %v1092 = vmul.f32 %v1072, 1.442695
      %v1093 = vpow.pop %v1092
      %v1094 = vmul.f32 %v1073, 1.442695
      %v1095 = vpow.pop %v1094
      %v1096 = vmul.f32 %v1074, 1.442695
      %v1097 = vpow.pop %v1096
      %v1098 = vmul.f32 %v1075, 1.442695
      %v1099 = vpow.pop %v1098
      %v1100 = vmul.f32 %v1076, 1.442695
      %v1101 = vpow.pop %v1100
      %v1102 = vmul.f32 %v1077, 1.442695
      %v1103 = vpow.pop %v1102
      %v1104 = vmul.f32 %v1078, 1.442695
      %v1105 = vpow.pop %v1104
      %v1106 = vmul.f32 %v1079, 1.442695
      %v1107 = vpow.pop %v1106
      %v1108 = vmul.f32 %v1080, 1.442695
      %v1109 = vpow.pop %v1108
      %v1110 = vmul.f32 %v1081, 1.442695
      %v1111 = vpow.pop %v1110
      %v1112 = vmul.f32 %v1082, 1.442695
      %v1113 = vpow.pop %v1112
      %v1114 = vmul.f32 %v1083, 1.442695
      %v1115 = vpow.pop %v1114
      %v1116 = vsel %vm1019, %v1085, 0.0
      %1117 = vadd.xlane.f32.xlu0 %v1116
      %v1118 = vpop.xlane.xlu0 %1117
      %v1119 = vsel %vm1019, %v1087, 0.0
      %1120 = vadd.xlane.f32.xlu0 %v1119
      %v1121 = vpop.xlane.xlu0 %1120
      %v1122 = vsel %vm1019, %v1089, 0.0
      %1123 = vadd.xlane.f32.xlu0 %v1122
      %v1124 = vpop.xlane.xlu0 %1123
      %v1125 = vsel %vm1019, %v1091, 0.0
      %1126 = vadd.xlane.f32.xlu0 %v1125
      %v1127 = vpop.xlane.xlu0 %1126
      %v1128 = vsel %vm1019, %v1093, 0.0
      %1129 = vadd.xlane.f32.xlu0 %v1128
      %v1130 = vpop.xlane.xlu0 %1129
      %v1131 = vsel %vm1019, %v1095, 0.0
      %1132 = vadd.xlane.f32.xlu0 %v1131
      %v1133 = vpop.xlane.xlu0 %1132
      %v1134 = vsel %vm1019, %v1097, 0.0
      %1135 = vadd.xlane.f32.xlu0 %v1134
      %v1136 = vpop.xlane.xlu0 %1135
      %v1137 = vsel %vm1019, %v1099, 0.0
      %1138 = vadd.xlane.f32.xlu0 %v1137
      %v1139 = vpop.xlane.xlu0 %1138
      %v1140 = vsel %vm1019, %v1101, 0.0
      %1141 = vadd.xlane.f32.xlu0 %v1140
      %v1142 = vpop.xlane.xlu0 %1141
      %v1143 = vsel %vm1019, %v1103, 0.0
      %1144 = vadd.xlane.f32.xlu0 %v1143
      %v1145 = vpop.xlane.xlu0 %1144
      %v1146 = vsel %vm1019, %v1105, 0.0
      %1147 = vadd.xlane.f32.xlu0 %v1146
      %v1148 = vpop.xlane.xlu0 %1147
      %v1149 = vsel %vm1019, %v1107, 0.0
      %1150 = vadd.xlane.f32.xlu0 %v1149
      %v1151 = vpop.xlane.xlu0 %1150
      %v1152 = vsel %vm1019, %v1109, 0.0
      %1153 = vadd.xlane.f32.xlu0 %v1152
      %v1154 = vpop.xlane.xlu0 %1153
      %v1155 = vsel %vm1019, %v1111, 0.0
      %1156 = vadd.xlane.f32.xlu0 %v1155
      %v1157 = vpop.xlane.xlu0 %1156
      %v1158 = vsel %vm1019, %v1113, 0.0
      %1159 = vadd.xlane.f32.xlu0 %v1158
      %v1160 = vpop.xlane.xlu0 %1159
      %v1161 = vsel %vm1019, %v1115, 0.0
      %1162 = vadd.xlane.f32.xlu0 %v1161
      %v1163 = vpop.xlane.xlu0 %1162
      %v1164 = vlog2.pop %v1118
      %v1165 = vmul.f32 %v1164, 0.6931472
      %v1166 = vlog2.pop %v1121
      %v1167 = vmul.f32 %v1166, 0.6931472
      %v1168 = vlog2.pop %v1124
      %v1169 = vmul.f32 %v1168, 0.6931472
      %v1170 = vlog2.pop %v1127
      %v1171 = vmul.f32 %v1170, 0.6931472
      %v1172 = vlog2.pop %v1130
      %v1173 = vmul.f32 %v1172, 0.6931472
      %v1174 = vlog2.pop %v1133
      %v1175 = vmul.f32 %v1174, 0.6931472
      %v1176 = vlog2.pop %v1136
      %v1177 = vmul.f32 %v1176, 0.6931472
      %v1178 = vlog2.pop %v1139
      %v1179 = vmul.f32 %v1178, 0.6931472
      %v1180 = vlog2.pop %v1142
      %v1181 = vmul.f32 %v1180, 0.6931472
      %v1182 = vlog2.pop %v1145
      %v1183 = vmul.f32 %v1182, 0.6931472
      %v1184 = vlog2.pop %v1148
      %v1185 = vmul.f32 %v1184, 0.6931472
      %v1186 = vlog2.pop %v1151
      %v1187 = vmul.f32 %v1186, 0.6931472
      %v1188 = vlog2.pop %v1154
      %v1189 = vmul.f32 %v1188, 0.6931472
      %v1190 = vlog2.pop %v1157
      %v1191 = vmul.f32 %v1190, 0.6931472
      %v1192 = vlog2.pop %v1160
      %v1193 = vmul.f32 %v1192, 0.6931472
      %v1194 = vlog2.pop %v1163
      %v1195 = vmul.f32 %v1194, 0.6931472
      %v1196 = vadd.f32 %v1022, %v1165
      %v1197 = vadd.f32 %v1025, %v1167
      %v1198 = vadd.f32 %v1028, %v1169
      %v1199 = vadd.f32 %v1031, %v1171
      %v1200 = vadd.f32 %v1034, %v1173
      %v1201 = vadd.f32 %v1037, %v1175
      %v1202 = vadd.f32 %v1040, %v1177
      %v1203 = vadd.f32 %v1043, %v1179
      %v1204 = vadd.f32 %v1046, %v1181
      %v1205 = vadd.f32 %v1049, %v1183
      %v1206 = vadd.f32 %v1052, %v1185
      %v1207 = vadd.f32 %v1055, %v1187
      %v1208 = vadd.f32 %v1058, %v1189
      %v1209 = vadd.f32 %v1061, %v1191
      %v1210 = vadd.f32 %v1064, %v1193
      %v1211 = vadd.f32 %v1067, %v1195
      %v1212 = vlaneseq
      %v1213 = vand.u32 %v1212, 127
      %v1214 = vld [vmem:[%s240] sm:$0xff]
      %v1215 = vld [vmem:[%s240 + $0x8] sm:$0xff]
      %v1216 = vld [vmem:[%s240 + $0x10] sm:$0xff]
      %v1217 = vld [vmem:[%s240 + $0x18] sm:$0xff]
      %v1218 = vld [vmem:[%s240 + $0x20] sm:$0xff]
      %v1219 = vld [vmem:[%s240 + $0x28] sm:$0xff]
      %v1220 = vld [vmem:[%s240 + $0x30] sm:$0xff]
      %v1221 = vld [vmem:[%s240 + $0x38] sm:$0xff]
      %v1222 = vld [vmem:[%s240 + $0x40] sm:$0xff]
      %v1223 = vld [vmem:[%s240 + $0x48] sm:$0xff]
      %v1224 = vld [vmem:[%s240 + $0x50] sm:$0xff]
      %v1225 = vld [vmem:[%s240 + $0x58] sm:$0xff]
      %v1226 = vld [vmem:[%s240 + $0x60] sm:$0xff]
      %v1227 = vld [vmem:[%s240 + $0x68] sm:$0xff]
      %v1228 = vld [vmem:[%s240 + $0x70] sm:$0xff]
      %v1229 = vld [vmem:[%s240 + $0x78] sm:$0xff]
      %1230 = vset.pattern.permute.xlu0 0
      %1231 = vperm.xlu0 %1230, %v1214
      %v1232 = vpop.permute.xlu0 %1231
      %1233 = vset.pattern.permute.xlu0 0
      %1234 = vperm.xlu0 %1233, %v1215
      %v1235 = vpop.permute.xlu0 %1234
      %1236 = vset.pattern.permute.xlu0 0
      %1237 = vperm.xlu0 %1236, %v1216
      %v1238 = vpop.permute.xlu0 %1237
      %1239 = vset.pattern.permute.xlu0 0
      %1240 = vperm.xlu0 %1239, %v1217
      %v1241 = vpop.permute.xlu0 %1240
      %1242 = vset.pattern.permute.xlu0 0
      %1243 = vperm.xlu0 %1242, %v1218
      %v1244 = vpop.permute.xlu0 %1243
      %1245 = vset.pattern.permute.xlu0 0
      %1246 = vperm.xlu0 %1245, %v1219
      %v1247 = vpop.permute.xlu0 %1246
      %1248 = vset.pattern.permute.xlu0 0
      %1249 = vperm.xlu0 %1248, %v1220
      %v1250 = vpop.permute.xlu0 %1249
      %1251 = vset.pattern.permute.xlu0 0
      %1252 = vperm.xlu0 %1251, %v1221
      %v1253 = vpop.permute.xlu0 %1252
      %1254 = vset.pattern.permute.xlu0 0
      %1255 = vperm.xlu0 %1254, %v1222
      %v1256 = vpop.permute.xlu0 %1255
      %1257 = vset.pattern.permute.xlu0 0
      %1258 = vperm.xlu0 %1257, %v1223
      %v1259 = vpop.permute.xlu0 %1258
      %1260 = vset.pattern.permute.xlu0 0
      %1261 = vperm.xlu0 %1260, %v1224
      %v1262 = vpop.permute.xlu0 %1261
      %1263 = vset.pattern.permute.xlu0 0
      %1264 = vperm.xlu0 %1263, %v1225
      %v1265 = vpop.permute.xlu0 %1264
      %1266 = vset.pattern.permute.xlu0 0
      %1267 = vperm.xlu0 %1266, %v1226
      %v1268 = vpop.permute.xlu0 %1267
      %1269 = vset.pattern.permute.xlu0 0
      %1270 = vperm.xlu0 %1269, %v1227
      %v1271 = vpop.permute.xlu0 %1270
      %1272 = vset.pattern.permute.xlu0 0
      %1273 = vperm.xlu0 %1272, %v1228
      %v1274 = vpop.permute.xlu0 %1273
      %1275 = vset.pattern.permute.xlu0 0
      %1276 = vperm.xlu0 %1275, %v1229
      %v1277 = vpop.permute.xlu0 %1276
      %vm1278 = vcmp.eq.s32.totalorder %v1213, %v1232
      %vm1279 = vcmp.eq.s32.totalorder %v1213, %v1235
      %vm1280 = vcmp.eq.s32.totalorder %v1213, %v1238
      %vm1281 = vcmp.eq.s32.totalorder %v1213, %v1241
      %vm1282 = vcmp.eq.s32.totalorder %v1213, %v1244
      %vm1283 = vcmp.eq.s32.totalorder %v1213, %v1247
      %vm1284 = vcmp.eq.s32.totalorder %v1213, %v1250
      %vm1285 = vcmp.eq.s32.totalorder %v1213, %v1253
      %vm1286 = vcmp.eq.s32.totalorder %v1213, %v1256
      %vm1287 = vcmp.eq.s32.totalorder %v1213, %v1259
      %vm1288 = vcmp.eq.s32.totalorder %v1213, %v1262
      %vm1289 = vcmp.eq.s32.totalorder %v1213, %v1265
      %vm1290 = vcmp.eq.s32.totalorder %v1213, %v1268
      %vm1291 = vcmp.eq.s32.totalorder %v1213, %v1271
      %vm1292 = vcmp.eq.s32.totalorder %v1213, %v1274
      %vm1293 = vcmp.eq.s32.totalorder %v1213, %v1277
      %v1294 = vsel %vm1278, 1, 0
      %v1295 = vsel %vm1279, 1, 0
      %v1296 = vsel %vm1280, 1, 0
      %v1297 = vsel %vm1281, 1, 0
      %v1298 = vsel %vm1282, 1, 0
      %v1299 = vsel %vm1283, 1, 0
      %v1300 = vsel %vm1284, 1, 0
      %v1301 = vsel %vm1285, 1, 0
      %v1302 = vsel %vm1286, 1, 0
      %v1303 = vsel %vm1287, 1, 0
      %v1304 = vsel %vm1288, 1, 0
      %v1305 = vsel %vm1289, 1, 0
      %v1306 = vsel %vm1290, 1, 0
      %v1307 = vsel %vm1291, 1, 0
      %v1308 = vsel %vm1292, 1, 0
      %v1309 = vsel %vm1293, 1, 0
      %v1310 = vcvt.s32.f32 %v1294
      %v1311 = vcvt.s32.f32 %v1295
      %v1312 = vcvt.s32.f32 %v1296
      %v1313 = vcvt.s32.f32 %v1297
      %v1314 = vcvt.s32.f32 %v1298
      %v1315 = vcvt.s32.f32 %v1299
      %v1316 = vcvt.s32.f32 %v1300
      %v1317 = vcvt.s32.f32 %v1301
      %v1318 = vcvt.s32.f32 %v1302
      %v1319 = vcvt.s32.f32 %v1303
      %v1320 = vcvt.s32.f32 %v1304
      %v1321 = vcvt.s32.f32 %v1305
      %v1322 = vcvt.s32.f32 %v1306
      %v1323 = vcvt.s32.f32 %v1307
      %v1324 = vcvt.s32.f32 %v1308
      %v1325 = vcvt.s32.f32 %v1309
      %v1326 = vmul.f32 %v1310, %v957
      %v1327 = vmul.f32 %v1311, %v960
      %v1328 = vmul.f32 %v1312, %v965
      %v1329 = vmul.f32 %v1313, %v968
      %v1330 = vmul.f32 %v1314, %v973
      %v1331 = vmul.f32 %v1315, %v976
      %v1332 = vmul.f32 %v1316, %v981
      %v1333 = vmul.f32 %v1317, %v984
      %v1334 = vmul.f32 %v1318, %v989
      %v1335 = vmul.f32 %v1319, %v992
      %v1336 = vmul.f32 %v1320, %v997
      %v1337 = vmul.f32 %v1321, %v1000
      %v1338 = vmul.f32 %v1322, %v1005
      %v1339 = vmul.f32 %v1323, %v1008
      %v1340 = vmul.f32 %v1324, %v1013
      %v1341 = vmul.f32 %v1325, %v1016
      %v1342 = vsel %vm1019, %v1326, 0.0
      %1343 = vadd.xlane.f32.xlu0 %v1342
      %v1344 = vpop.xlane.xlu0 %1343
      %v1345 = vsel %vm1019, %v1327, 0.0
      %1346 = vadd.xlane.f32.xlu0 %v1345
      %v1347 = vpop.xlane.xlu0 %1346
      %v1348 = vsel %vm1019, %v1328, 0.0
      %1349 = vadd.xlane.f32.xlu0 %v1348
      %v1350 = vpop.xlane.xlu0 %1349
      %v1351 = vsel %vm1019, %v1329, 0.0
      %1352 = vadd.xlane.f32.xlu0 %v1351
      %v1353 = vpop.xlane.xlu0 %1352
      %v1354 = vsel %vm1019, %v1330, 0.0
      %1355 = vadd.xlane.f32.xlu0 %v1354
      %v1356 = vpop.xlane.xlu0 %1355
      %v1357 = vsel %vm1019, %v1331, 0.0
      %1358 = vadd.xlane.f32.xlu0 %v1357
      %v1359 = vpop.xlane.xlu0 %1358
      %v1360 = vsel %vm1019, %v1332, 0.0
      %1361 = vadd.xlane.f32.xlu0 %v1360
      %v1362 = vpop.xlane.xlu0 %1361
      %v1363 = vsel %vm1019, %v1333, 0.0
      %1364 = vadd.xlane.f32.xlu0 %v1363
      %v1365 = vpop.xlane.xlu0 %1364
      %v1366 = vsel %vm1019, %v1334, 0.0
      %1367 = vadd.xlane.f32.xlu0 %v1366
      %v1368 = vpop.xlane.xlu0 %1367
      %v1369 = vsel %vm1019, %v1335, 0.0
      %1370 = vadd.xlane.f32.xlu0 %v1369
      %v1371 = vpop.xlane.xlu0 %1370
      %v1372 = vsel %vm1019, %v1336, 0.0
      %1373 = vadd.xlane.f32.xlu0 %v1372
      %v1374 = vpop.xlane.xlu0 %1373
      %v1375 = vsel %vm1019, %v1337, 0.0
      %1376 = vadd.xlane.f32.xlu0 %v1375
      %v1377 = vpop.xlane.xlu0 %1376
      %v1378 = vsel %vm1019, %v1338, 0.0
      %1379 = vadd.xlane.f32.xlu0 %v1378
      %v1380 = vpop.xlane.xlu0 %1379
      %v1381 = vsel %vm1019, %v1339, 0.0
      %1382 = vadd.xlane.f32.xlu0 %v1381
      %v1383 = vpop.xlane.xlu0 %1382
      %v1384 = vsel %vm1019, %v1340, 0.0
      %1385 = vadd.xlane.f32.xlu0 %v1384
      %v1386 = vpop.xlane.xlu0 %1385
      %v1387 = vsel %vm1019, %v1341, 0.0
      %1388 = vadd.xlane.f32.xlu0 %v1387
      %v1389 = vpop.xlane.xlu0 %1388
      %v1390 = vsub.f32 %v1196, %v1344
      %v1391 = vsub.f32 %v1197, %v1347
      %v1392 = vsub.f32 %v1198, %v1350
      %v1393 = vsub.f32 %v1199, %v1353
      %v1394 = vsub.f32 %v1200, %v1356
      %v1395 = vsub.f32 %v1201, %v1359
      %v1396 = vsub.f32 %v1202, %v1362
      %v1397 = vsub.f32 %v1203, %v1365
      %v1398 = vsub.f32 %v1204, %v1368
      %v1399 = vsub.f32 %v1205, %v1371
      %v1400 = vsub.f32 %v1206, %v1374
      %v1401 = vsub.f32 %v1207, %v1377
      %v1402 = vsub.f32 %v1208, %v1380
      %v1403 = vsub.f32 %v1209, %v1383
      %v1404 = vsub.f32 %v1210, %v1386
      %v1405 = vsub.f32 %v1211, %v1389
      %v1406 = vlaneseq
      %v1407 = vshrl.u32 %v1406, 7
      %v1408 = vadd.s32 %v1407, 8
      %v1409 = vadd.s32 %v1407, 16
      %v1410 = vadd.s32 %v1407, 24
      %v1411 = vadd.s32 %v1407, 32
      %v1412 = vadd.s32 %v1407, 40
      %v1413 = vadd.s32 %v1407, 48
      %v1414 = vadd.s32 %v1407, 56
      %v1415 = vadd.s32 %v1407, 64
      %v1416 = vadd.s32 %v1407, 72
      %v1417 = vadd.s32 %v1407, 80
      %v1418 = vadd.s32 %v1407, 88
      %v1419 = vadd.s32 %v1407, 96
      %v1420 = vadd.s32 %v1407, 104
      %v1421 = vadd.s32 %v1407, 112
      %v1422 = vadd.s32 %v1407, 120
      %s1423 = smul.u32 %s16, 128
      %v1424 = vstv %s1423
      %v1425 = vadd.s32 %v1407, %v1424
      %v1426 = vadd.s32 %v1408, %v1424
      %v1427 = vadd.s32 %v1409, %v1424
      %v1428 = vadd.s32 %v1410, %v1424
      %v1429 = vadd.s32 %v1411, %v1424
      %v1430 = vadd.s32 %v1412, %v1424
      %v1431 = vadd.s32 %v1413, %v1424
      %v1432 = vadd.s32 %v1414, %v1424
      %v1433 = vadd.s32 %v1415, %v1424
      %v1434 = vadd.s32 %v1416, %v1424
      %v1435 = vadd.s32 %v1417, %v1424
      %v1436 = vadd.s32 %v1418, %v1424
      %v1437 = vadd.s32 %v1419, %v1424
      %v1438 = vadd.s32 %v1420, %v1424
      %v1439 = vadd.s32 %v1421, %v1424
      %v1440 = vadd.s32 %v1422, %v1424
      %vm1441 = vcmp.lt.s32.totalorder %v1425, 200
      %vm1442 = vcmp.lt.s32.totalorder %v1426, 200
      %vm1443 = vcmp.lt.s32.totalorder %v1427, 200
      %vm1444 = vcmp.lt.s32.totalorder %v1428, 200
      %vm1445 = vcmp.lt.s32.totalorder %v1429, 200
      %vm1446 = vcmp.lt.s32.totalorder %v1430, 200
      %vm1447 = vcmp.lt.s32.totalorder %v1431, 200
      %vm1448 = vcmp.lt.s32.totalorder %v1432, 200
      %vm1449 = vcmp.lt.s32.totalorder %v1433, 200
      %vm1450 = vcmp.lt.s32.totalorder %v1434, 200
      %vm1451 = vcmp.lt.s32.totalorder %v1435, 200
      %vm1452 = vcmp.lt.s32.totalorder %v1436, 200
      %vm1453 = vcmp.lt.s32.totalorder %v1437, 200
      %vm1454 = vcmp.lt.s32.totalorder %v1438, 200
      %vm1455 = vcmp.lt.s32.totalorder %v1439, 200
      %vm1456 = vcmp.lt.s32.totalorder %v1440, 200
      %v1457 = vsel %vm1441, 1, 0
      %v1458 = vsel %vm1442, 1, 0
      %v1459 = vsel %vm1443, 1, 0
      %v1460 = vsel %vm1444, 1, 0
      %v1461 = vsel %vm1445, 1, 0
      %v1462 = vsel %vm1446, 1, 0
      %v1463 = vsel %vm1447, 1, 0
      %v1464 = vsel %vm1448, 1, 0
      %v1465 = vsel %vm1449, 1, 0
      %v1466 = vsel %vm1450, 1, 0
      %v1467 = vsel %vm1451, 1, 0
      %v1468 = vsel %vm1452, 1, 0
      %v1469 = vsel %vm1453, 1, 0
      %v1470 = vsel %vm1454, 1, 0
      %v1471 = vsel %vm1455, 1, 0
      %v1472 = vsel %vm1456, 1, 0
      %v1473 = vcvt.s32.f32 %v1457
      %v1474 = vcvt.s32.f32 %v1458
      %v1475 = vcvt.s32.f32 %v1459
      %v1476 = vcvt.s32.f32 %v1460
      %v1477 = vcvt.s32.f32 %v1461
      %v1478 = vcvt.s32.f32 %v1462
      %v1479 = vcvt.s32.f32 %v1463
      %v1480 = vcvt.s32.f32 %v1464
      %v1481 = vcvt.s32.f32 %v1465
      %v1482 = vcvt.s32.f32 %v1466
      %v1483 = vcvt.s32.f32 %v1467
      %v1484 = vcvt.s32.f32 %v1468
      %v1485 = vcvt.s32.f32 %v1469
      %v1486 = vcvt.s32.f32 %v1470
      %v1487 = vcvt.s32.f32 %v1471
      %v1488 = vcvt.s32.f32 %v1472
      %v1489 = vmul.f32 %v1390, %v1473
      %v1490 = vmul.f32 %v1391, %v1474
      %v1491 = vmul.f32 %v1392, %v1475
      %v1492 = vmul.f32 %v1393, %v1476
      %v1493 = vmul.f32 %v1394, %v1477
      %v1494 = vmul.f32 %v1395, %v1478
      %v1495 = vmul.f32 %v1396, %v1479
      %v1496 = vmul.f32 %v1397, %v1480
      %v1497 = vmul.f32 %v1398, %v1481
      %v1498 = vmul.f32 %v1399, %v1482
      %v1499 = vmul.f32 %v1400, %v1483
      %v1500 = vmul.f32 %v1401, %v1484
      %v1501 = vmul.f32 %v1402, %v1485
      %v1502 = vmul.f32 %v1403, %v1486
      %v1503 = vmul.f32 %v1404, %v1487
      %v1504 = vmul.f32 %v1405, %v1488
      %v1505 = vadd.f32 %v1489, %v1490
      %v1506 = vadd.f32 %v1505, %v1491
      %v1507 = vadd.f32 %v1506, %v1492
      %v1508 = vadd.f32 %v1507, %v1493
      %v1509 = vadd.f32 %v1508, %v1494
      %v1510 = vadd.f32 %v1509, %v1495
      %v1511 = vadd.f32 %v1510, %v1496
      %v1512 = vadd.f32 %v1511, %v1497
      %v1513 = vadd.f32 %v1512, %v1498
      %v1514 = vadd.f32 %v1513, %v1499
      %v1515 = vadd.f32 %v1514, %v1500
      %v1516 = vadd.f32 %v1515, %v1501
      %v1517 = vadd.f32 %v1516, %v1502
      %v1518 = vadd.f32 %v1517, %v1503
      %v1519 = vadd.f32 %v1518, %v1504
      %v1520 = vrot.slane %v1519, 4
      %v1521 = vadd.f32 %v1519, %v1520
      %v1522 = vrot.slane %v1521, 2
      %v1523 = vadd.f32 %v1521, %v1522
      %v1524 = vrot.slane %v1523, 1
      %v1525 = vadd.f32 %v1523, %v1524
      %vm1526 = vcmask 0
      %1527 = vst.msk [vmem:[%s244] sm:$0x1] %vm1526, %v1525
      %p1528 = scmp.lt.s32.totalorder %s16, 1
      %s1529 = scalar_select %p1528, %s16, 1
      %s1530 = scalar_lea.vmem %s5, %s1529
      // Predicated region
      $region41: #{tpu_custom_call.1} parent=39 // pred_check
        %p1531 = pneg %p149
      $region42: #{tpu_custom_call.1} parent=39 // pred_check_branch
        %1533 = sbr.rel (%p1531) target = $region44
      $region43: #{tpu_custom_call.1} parent=39 // pred_region
        _
      $region44: #{tpu_custom_call.1} parent=39 // pred_fallthru
        _
    $region40: #{tpu_custom_call.1} parent=5 // pred_fallthru
      _
    %p1534 = scmp.le.s32.totalorder 2, %s11
    // Predicated region
    $region45: #{tpu_custom_call.1} parent=5 // pred_check
      %p1535 = pneg %p1534
    $region46: #{tpu_custom_call.1} parent=5 // pred_check_branch
      %1537 = sbr.rel (%p1535) target = $region48
    $region47: #{tpu_custom_call.1} parent=5 // pred_region
      %s1538 = ssub.s32 %s11, 2
      // Predicated region
      $region49: #{tpu_custom_call.1} parent=47 // pred_check
        %p1539 = pneg %p155
      $region50: #{tpu_custom_call.1} parent=47 // pred_check_branch
        %1541 = sbr.rel (%p1539) target = $region52
      $region51: #{tpu_custom_call.1} parent=47 // pred_region
        %p1542 = scmp.lt.s32.totalorder %s17, 1
        %s1543 = scalar_select %p1542, %s17, 1
        %s1544 = scalar_lea.vmem %s5, %s1543
      $region52: #{tpu_custom_call.1} parent=47 // pred_fallthru
        _
    $region48: #{tpu_custom_call.1} parent=5 // pred_fallthru
      _
  $region6: #{tpu_custom_call.1} parent=0 // loop_footer
    %s15 = sadd.s32 1, %s11
  $region7: #{tpu_custom_call.1} parent=0 // loop_footer_branch
    %10 = sbr.rel target = $region3
  $region8: #{tpu_custom_call.1} parent=0 // loop_exit
    _

</llo_original>
